<compile_context>
chip_gen: v6e
topology: v6e:2x2x1
jax: 0.10.0
libtpu: 0.0.40
codegen_flags: <defaults>
</compile_context>

<pallas_src>
import jax
import jax.numpy as jnp
import numpy as np
from jax.experimental import pallas as pl
from jax.experimental.pallas import tpu as pltpu

OUT_ROWS = 8  # final-layer output rows (row 0 real, rows 1..7 zero padding)


def _round_up(x, m):
    return ((x + m - 1) // m) * m


# -----------------------------------------------------------------------------
# Kernel: dot -> ReLU -> dot -> ReLU -> dot -> ReLU -> dot (all folded params)
# -----------------------------------------------------------------------------
def edge_regressor_kernel(x_ref, w1_ref, b1_ref, w2_ref, b2_ref,
                          w3_ref, b3_ref, w4_ref, b4_ref, out_ref):
    cdt = w1_ref.dtype                                     # compute dtype (bf16)
    x = x_ref[...]                                         # [F_pad, TB]
    h = jnp.dot(w1_ref[...], x, preferred_element_type=jnp.float32) + b1_ref[...]
    h = jnp.maximum(h, 0.0).astype(cdt)                    # ReLU
    h = jnp.dot(w2_ref[...], h, preferred_element_type=jnp.float32) + b2_ref[...]
    h = jnp.maximum(h, 0.0).astype(cdt)                    # ReLU (regression head)
    h = jnp.dot(w3_ref[...], h, preferred_element_type=jnp.float32) + b3_ref[...]
    h = jnp.maximum(h, 0.0).astype(cdt)                    # ReLU
    out_ref[...] = (jnp.dot(w4_ref[...], h, preferred_element_type=jnp.float32)
                    + b4_ref[...]).astype(out_ref.dtype)   # [8, TB]


# -----------------------------------------------------------------------------
# Raw (un-folded) parameters, matching the PyTorch module in eval mode
# -----------------------------------------------------------------------------
def make_params(key, num_node_features, num_edge_features, hidden_dim):
    f_in = num_edge_features + 2 * num_node_features
    ks = jax.random.split(key, 24)

    def lin(kw, kb, i, o):
        w = jax.random.normal(kw, (i, o), jnp.float32) * 0.1
        b = jax.random.normal(kb, (1, o), jnp.float32) * 0.1
        return w, b

    def bn(kg, kb, km, kv, c, eps=1e-5):
        gamma = 1.0 + 0.1 * jax.random.normal(kg, (1, c), jnp.float32)
        beta = 0.1 * jax.random.normal(kb, (1, c), jnp.float32)
        mean = 0.1 * jax.random.normal(km, (1, c), jnp.float32)
        var = 1.0 + 0.1 * jax.random.uniform(kv, (1, c), jnp.float32)
        scale = gamma / jnp.sqrt(var + eps)                # folded eval-mode BN
        shift = beta - mean * scale
        return scale, shift

    w1, b1 = lin(ks[0], ks[1], f_in, hidden_dim)
    s1, t1 = bn(ks[2], ks[3], ks[4], ks[5], hidden_dim)
    w2, b2 = lin(ks[6], ks[7], hidden_dim, hidden_dim)
    s2, t2 = bn(ks[8], ks[9], ks[10], ks[11], hidden_dim)
    w3, b3 = lin(ks[12], ks[13], hidden_dim, hidden_dim)
    s3, t3 = bn(ks[14], ks[15], ks[16], ks[17], hidden_dim)
    w4, b4 = lin(ks[18], ks[19], hidden_dim, 1)
    node_weight = jnp.array([[1.0]], dtype=jnp.float32)    # Parameter(1.0)
    return dict(w1=w1, b1=b1, s1=s1, t1=t1, w2=w2, b2=b2,
                s2=s2, t2=t2, w3=w3, b3=b3, s3=s3, t3=t3,
                w4=w4, b4=b4, node_weight=node_weight)


# -----------------------------------------------------------------------------
# Fold BN(eval) / biases / node_weight into the linear layers, transpose to
# [out, in] layout, zero-pad feature dims to 128, cast weights to bf16.
# -----------------------------------------------------------------------------
def fold_params(params, compute_dtype=jnp.bfloat16):
    w1, b1 = params["w1"], params["b1"]
    s1, t1 = params["s1"], params["t1"]
    w2, b2 = params["w2"], params["b2"]
    s2, t2 = params["s2"], params["t2"]
    w3, b3 = params["w3"], params["b3"]
    s3, t3 = params["s3"], params["t3"]
    w4, b4 = params["w4"], params["b4"]
    nw = params["node_weight"][0, 0]

    # layer-2 absorbs BN1 and node_weight; layer-3 absorbs BN2; layer-4 absorbs BN3
    W2f = nw * (s1.T * w2)                 # [H, H]
    B2f = nw * (t1 @ w2 + b2)              # [1, H]
    W3f = s2.T * w3
    B3f = t2 @ w3 + b3
    W4f = s3.T * w4                        # [H, 1]
    B4f = t3 @ w4 + b4                     # [1, 1]

    F_in, H = w1.shape
    F_pad = _round_up(F_in, 128)
    H_pad = _round_up(H, 128)

    def padT(w, rows, cols):               # transpose to [out, in] and zero-pad
        out = jnp.zeros((rows, cols), jnp.float32)
        wt = w.T
        return out.at[:wt.shape[0], :wt.shape[1]].set(wt)

    def padB(b, rows):                     # bias -> [rows, 1]
        out = jnp.zeros((rows, 1), jnp.float32)
        return out.at[:b.shape[1], :].set(b.T)

    folded = dict(
        w1=padT(w1, H_pad, F_pad).astype(compute_dtype),
        b1=padB(b1, H_pad),
        w2=padT(W2f, H_pad, H_pad).astype(compute_dtype),
        b2=padB(B2f, H_pad),
        w3=padT(W3f, H_pad, H_pad).astype(compute_dtype),
        b3=padB(B3f, H_pad),
        w4=padT(W4f, OUT_ROWS, H_pad).astype(compute_dtype),
        b4=padB(B4f, OUT_ROWS),
        f_in=F_in, f_pad=F_pad, h_pad=H_pad,
    )
    return folded


# -----------------------------------------------------------------------------
# Forward wrapper
# -----------------------------------------------------------------------------
def edge_regressor_forward(folded, x_nodes, x_edges_batch, edge_indices_batch,
                           edge_indices=None, edge_weight=None,
                           *, tile_b=512, compute_dtype=jnp.bfloat16):
    # glue: gather endpoints + concat (XLA)
    x_left = jnp.take(x_nodes, edge_indices_batch[:, 0], axis=0)
    x_right = jnp.take(x_nodes, edge_indices_batch[:, 1], axis=0)
    x_cat = jnp.concatenate([x_left, x_edges_batch, x_right], axis=-1)   # [B, F]

    B, F_in = x_cat.shape
    F_pad, H_pad = folded["f_pad"], folded["h_pad"]
    num_tiles = pl.cdiv(B, tile_b)
    B_pad = num_tiles * tile_b

    # transposed + padded input: batch on the lane axis
    x_t = jnp.zeros((F_pad, B_pad), compute_dtype)
    x_t = x_t.at[:F_in, :B].set(x_cat.T.astype(compute_dtype))

    def resident(arr):                      # weight stays in VMEM across steps
        return pl.BlockSpec(arr.shape, lambda i: (0, 0))

    w1, b1 = folded["w1"], folded["b1"]
    w2, b2 = folded["w2"], folded["b2"]
    w3, b3 = folded["w3"], folded["b3"]
    w4, b4 = folded["w4"], folded["b4"]

    out = pl.pallas_call(
        edge_regressor_kernel,
        out_shape=jax.ShapeDtypeStruct((OUT_ROWS, B_pad), jnp.float32),
        grid=(num_tiles,),
        in_specs=[
            pl.BlockSpec((F_pad, tile_b), lambda i: (0, i)),
            resident(w1), resident(b1),
            resident(w2), resident(b2),
            resident(w3), resident(b3),
            resident(w4), resident(b4),
        ],
        out_specs=pl.BlockSpec((OUT_ROWS, tile_b), lambda i: (0, i)),
        compiler_params=pltpu.CompilerParams(
            dimension_semantics=("parallel",),
            vmem_limit_bytes=64 * 1024 * 1024),
    )(x_t, w1, b1, w2, b2, w3, b3, w4, b4)

    return out[0, :B]                       # squeeze(-1) -> [B]


# -----------------------------------------------------------------------------
# References
# -----------------------------------------------------------------------------
def edge_regressor_reference(params, x_nodes, x_edges_batch, edge_indices_batch):
    """Un-folded, f32, exactly the module's eval-mode math."""
    x_left = x_nodes[edge_indices_batch[:, 0]]
    x_right = x_nodes[edge_indices_batch[:, 1]]
    h = jnp.concatenate([x_left, x_edges_batch, x_right], axis=-1)
    h = h @ params["w1"] + params["b1"]
    h = jnp.maximum(h, 0.0) * params["s1"] + params["t1"]
    h = h @ params["w2"] + params["b2"]
    h = params["node_weight"][0, 0] * h
    h = jnp.maximum(h, 0.0) * params["s2"] + params["t2"]
    h = h @ params["w3"] + params["b3"]
    h = jnp.maximum(h, 0.0) * params["s3"] + params["t3"]
    return (h @ params["w4"] + params["b4"])[:, 0]


def folded_reference(folded, x_nodes, x_edges_batch, edge_indices_batch,
                     compute_dtype=jnp.bfloat16):
    """Same folded/padded/bf16 math as the kernel, in plain JAX."""
    x_left = jnp.take(x_nodes, edge_indices_batch[:, 0], axis=0)
    x_right = jnp.take(x_nodes, edge_indices_batch[:, 1], axis=0)
    x_cat = jnp.concatenate([x_left, x_edges_batch, x_right], axis=-1)
    B, F_in = x_cat.shape
    F_pad = folded["f_pad"]
    x = jnp.zeros((F_pad, B), compute_dtype).at[:F_in, :].set(
        x_cat.T.astype(compute_dtype))
    h = jnp.dot(folded["w1"], x, preferred_element_type=jnp.float32) + folded["b1"]
    h = jnp.maximum(h, 0.0).astype(compute_dtype)
    h = jnp.dot(folded["w2"], h, preferred_element_type=jnp.float32) + folded["b2"]
    h = jnp.maximum(h, 0.0).astype(compute_dtype)
    h = jnp.dot(folded["w3"], h, preferred_element_type=jnp.float32) + folded["b3"]
    h = jnp.maximum(h, 0.0).astype(compute_dtype)
    out = jnp.dot(folded["w4"], h, preferred_element_type=jnp.float32) + folded["b4"]
    return out[0]


# -----------------------------------------------------------------------------
if __name__ == "__main__":
    # small shapes consistent with the module
    N = 10                      # number of nodes
    D = 8                       # num_node_features
    K = 16                      # num_edge_features
    H = 32                      # hidden_dim
    B = 8                       # edges in the batch

    key = jax.random.PRNGKey(0)
    k_nodes, k_edges, k_idx, k_params = jax.random.split(key, 4)

    x_nodes = jax.random.normal(k_nodes, (N, D), jnp.float32)
    x_edges_batch = jax.random.normal(k_edges, (B, K), jnp.float32)
    edge_indices_batch = jax.random.randint(k_idx, (B, 2), 0, N, dtype=jnp.int32)

    params = make_params(k_params, D, K, H)
    folded = fold_params(params, compute_dtype=jnp.bfloat16)

    out = edge_regressor_forward(folded, x_nodes, x_edges_batch,
                                 edge_indices_batch, tile_b=512)
    out = jax.block_until_ready(out)
    assert out.shape == (B,)

    # tight check: kernel vs identical folded/bf16 math in plain JAX
    ref_folded = folded_reference(folded, x_nodes, x_edges_batch,
                                  edge_indices_batch)
    np.testing.assert_allclose(np.asarray(out), np.asarray(ref_folded),
                               rtol=2e-3, atol=2e-3)

    # semantic check: kernel vs un-folded f32 module math (bf16 tolerance)
    ref_f32 = edge_regressor_reference(params, x_nodes, x_edges_batch,
                                       edge_indices_batch)
    np.testing.assert_allclose(np.asarray(out), np.asarray(ref_f32),
                               rtol=5e-2, atol=5e-2)

    print("KERNEL_OK")
</pallas_src>

<mosaic_0001>
module attributes {stable_mosaic.version = 11 : i64} {
  func.func @edge_regressor_kernel(%arg0: i32, %arg1: memref<128x512xbf16, #tpu.memory_space<vmem>>, %arg2: memref<128x128xbf16, #tpu.memory_space<vmem>>, %arg3: memref<128x1xf32, #tpu.memory_space<vmem>>, %arg4: memref<128x128xbf16, #tpu.memory_space<vmem>>, %arg5: memref<128x1xf32, #tpu.memory_space<vmem>>, %arg6: memref<128x128xbf16, #tpu.memory_space<vmem>>, %arg7: memref<128x1xf32, #tpu.memory_space<vmem>>, %arg8: memref<8x128xbf16, #tpu.memory_space<vmem>>, %arg9: memref<8x1xf32, #tpu.memory_space<vmem>>, %arg10: memref<8x512xf32, #tpu.memory_space<vmem>>) attributes {dimension_semantics = [#tpu.dimension_semantics<parallel>], iteration_bounds = array<i64: 1>, scalar_prefetch = 0 : i64, scratch_operands = 0 : i64, tpu.core_type = #tpu.core_type<tc>, window_params = [{transform_indices = @transform_0, window_bounds = array<i64: 128, 512>}, {pipeline_mode = #tpu.pipeline_mode<synchronous>, transform_indices = @transform_1, window_bounds = array<i64: 128, 128>}, {pipeline_mode = #tpu.pipeline_mode<synchronous>, transform_indices = @transform_2, window_bounds = array<i64: 128, 1>}, {pipeline_mode = #tpu.pipeline_mode<synchronous>, transform_indices = @transform_3, window_bounds = array<i64: 128, 128>}, {pipeline_mode = #tpu.pipeline_mode<synchronous>, transform_indices = @transform_4, window_bounds = array<i64: 128, 1>}, {pipeline_mode = #tpu.pipeline_mode<synchronous>, transform_indices = @transform_5, window_bounds = array<i64: 128, 128>}, {pipeline_mode = #tpu.pipeline_mode<synchronous>, transform_indices = @transform_6, window_bounds = array<i64: 128, 1>}, {pipeline_mode = #tpu.pipeline_mode<synchronous>, transform_indices = @transform_7, window_bounds = array<i64: 8, 128>}, {pipeline_mode = #tpu.pipeline_mode<synchronous>, transform_indices = @transform_8, window_bounds = array<i64: 8, 1>}, {transform_indices = @transform_9, window_bounds = array<i64: 8, 512>}]} {
    %c0 = arith.constant 0 : index
    %c0_0 = arith.constant 0 : index
    %0 = vector.load %arg1[%c0, %c0_0] : memref<128x512xbf16, #tpu.memory_space<vmem>>, vector<128x512xbf16>
    %c0_1 = arith.constant 0 : index
    %c0_2 = arith.constant 0 : index
    %1 = vector.load %arg2[%c0_1, %c0_2] : memref<128x128xbf16, #tpu.memory_space<vmem>>, vector<128x128xbf16>
    %cst = arith.constant dense<0.000000e+00> : vector<128x512xf32>
    %2 = tpu.matmul %1, %0, %cst {dimension_numbers = #tpu.dot_dimension_numbers<[1], [0], [0], [1], [0, 0, 1, 1], [], []>} : vector<128x128xbf16>, vector<128x512xbf16>, vector<128x512xf32> -> vector<128x512xf32>
    %c0_3 = arith.constant 0 : index
    %c0_4 = arith.constant 0 : index
    %3 = vector.load %arg3[%c0_3, %c0_4] : memref<128x1xf32, #tpu.memory_space<vmem>>, vector<128x1xf32>
    %4 = vector.broadcast %3 : vector<128x1xf32> to vector<128x512xf32>
    %5 = arith.addf %2, %4 : vector<128x512xf32>
    %cst_5 = arith.constant 0.000000e+00 : f32
    %6 = vector.broadcast %cst_5 : f32 to vector<128x512xf32>
    %7 = arith.maximumf %5, %6 : vector<128x512xf32>
    %8 = arith.truncf %7 : vector<128x512xf32> to vector<128x512xbf16>
    %c0_6 = arith.constant 0 : index
    %c0_7 = arith.constant 0 : index
    %9 = vector.load %arg4[%c0_6, %c0_7] : memref<128x128xbf16, #tpu.memory_space<vmem>>, vector<128x128xbf16>
    %cst_8 = arith.constant dense<0.000000e+00> : vector<128x512xf32>
    %10 = tpu.matmul %9, %8, %cst_8 {dimension_numbers = #tpu.dot_dimension_numbers<[1], [0], [0], [1], [0, 0, 1, 1], [], []>} : vector<128x128xbf16>, vector<128x512xbf16>, vector<128x512xf32> -> vector<128x512xf32>
    %c0_9 = arith.constant 0 : index
    %c0_10 = arith.constant 0 : index
    %11 = vector.load %arg5[%c0_9, %c0_10] : memref<128x1xf32, #tpu.memory_space<vmem>>, vector<128x1xf32>
    %12 = vector.broadcast %11 : vector<128x1xf32> to vector<128x512xf32>
    %13 = arith.addf %10, %12 : vector<128x512xf32>
    %cst_11 = arith.constant 0.000000e+00 : f32
    %14 = vector.broadcast %cst_11 : f32 to vector<128x512xf32>
    %15 = arith.maximumf %13, %14 : vector<128x512xf32>
    %16 = arith.truncf %15 : vector<128x512xf32> to vector<128x512xbf16>
    %c0_12 = arith.constant 0 : index
    %c0_13 = arith.constant 0 : index
    %17 = vector.load %arg6[%c0_12, %c0_13] : memref<128x128xbf16, #tpu.memory_space<vmem>>, vector<128x128xbf16>
    %cst_14 = arith.constant dense<0.000000e+00> : vector<128x512xf32>
    %18 = tpu.matmul %17, %16, %cst_14 {dimension_numbers = #tpu.dot_dimension_numbers<[1], [0], [0], [1], [0, 0, 1, 1], [], []>} : vector<128x128xbf16>, vector<128x512xbf16>, vector<128x512xf32> -> vector<128x512xf32>
    %c0_15 = arith.constant 0 : index
    %c0_16 = arith.constant 0 : index
    %19 = vector.load %arg7[%c0_15, %c0_16] : memref<128x1xf32, #tpu.memory_space<vmem>>, vector<128x1xf32>
    %20 = vector.broadcast %19 : vector<128x1xf32> to vector<128x512xf32>
    %21 = arith.addf %18, %20 : vector<128x512xf32>
    %cst_17 = arith.constant 0.000000e+00 : f32
    %22 = vector.broadcast %cst_17 : f32 to vector<128x512xf32>
    %23 = arith.maximumf %21, %22 : vector<128x512xf32>
    %24 = arith.truncf %23 : vector<128x512xf32> to vector<128x512xbf16>
    %c0_18 = arith.constant 0 : index
    %c0_19 = arith.constant 0 : index
    %25 = vector.load %arg8[%c0_18, %c0_19] : memref<8x128xbf16, #tpu.memory_space<vmem>>, vector<8x128xbf16>
    %cst_20 = arith.constant dense<0.000000e+00> : vector<8x512xf32>
    %26 = tpu.matmul %25, %24, %cst_20 {dimension_numbers = #tpu.dot_dimension_numbers<[1], [0], [0], [1], [0, 0, 1, 1], [], []>} : vector<8x128xbf16>, vector<128x512xbf16>, vector<8x512xf32> -> vector<8x512xf32>
    %c0_21 = arith.constant 0 : index
    %c0_22 = arith.constant 0 : index
    %27 = vector.load %arg9[%c0_21, %c0_22] : memref<8x1xf32, #tpu.memory_space<vmem>>, vector<8x1xf32>
    %28 = vector.broadcast %27 : vector<8x1xf32> to vector<8x512xf32>
    %29 = arith.addf %26, %28 : vector<8x512xf32>
    %c0_23 = arith.constant 0 : index
    %c0_24 = arith.constant 0 : index
    %30 = vector.load %arg10[%c0_23, %c0_24] : memref<8x512xf32, #tpu.memory_space<vmem>>, vector<8x512xf32>
    tpu.vector_store %arg10[%c0_23, %c0_24], %29 {strides = array<i32>} : memref<8x512xf32, #tpu.memory_space<vmem>>, vector<8x512xf32>,
    return
  }
  func.func @transform_0(%arg0: i32) -> (i32, i32) {
    %c0_i32 = arith.constant 0 : i32
    %c0_i32_0 = arith.constant 0 : i32
    return %c0_i32, %arg0 : i32, i32
  }
  func.func @transform_1(%arg0: i32) -> (i32, i32) {
    %c0_i32 = arith.constant 0 : i32
    %c0_i32_0 = arith.constant 0 : i32
    %c0_i32_1 = arith.constant 0 : i32
    return %c0_i32, %c0_i32_0 : i32, i32
  }
  func.func @transform_2(%arg0: i32) -> (i32, i32) {
    %c0_i32 = arith.constant 0 : i32
    %c0_i32_0 = arith.constant 0 : i32
    %c0_i32_1 = arith.constant 0 : i32
    return %c0_i32, %c0_i32_0 : i32, i32
  }
  func.func @transform_3(%arg0: i32) -> (i32, i32) {
    %c0_i32 = arith.constant 0 : i32
    %c0_i32_0 = arith.constant 0 : i32
    %c0_i32_1 = arith.constant 0 : i32
    return %c0_i32, %c0_i32_0 : i32, i32
  }
  func.func @transform_4(%arg0: i32) -> (i32, i32) {
    %c0_i32 = arith.constant 0 : i32
    %c0_i32_0 = arith.constant 0 : i32
    %c0_i32_1 = arith.constant 0 : i32
    return %c0_i32, %c0_i32_0 : i32, i32
  }
  func.func @transform_5(%arg0: i32) -> (i32, i32) {
    %c0_i32 = arith.constant 0 : i32
    %c0_i32_0 = arith.constant 0 : i32
    %c0_i32_1 = arith.constant 0 : i32
    return %c0_i32, %c0_i32_0 : i32, i32
  }
  func.func @transform_6(%arg0: i32) -> (i32, i32) {
    %c0_i32 = arith.constant 0 : i32
    %c0_i32_0 = arith.constant 0 : i32
    %c0_i32_1 = arith.constant 0 : i32
    return %c0_i32, %c0_i32_0 : i32, i32
  }
  func.func @transform_7(%arg0: i32) -> (i32, i32) {
    %c0_i32 = arith.constant 0 : i32
    %c0_i32_0 = arith.constant 0 : i32
    %c0_i32_1 = arith.constant 0 : i32
    return %c0_i32, %c0_i32_0 : i32, i32
  }
  func.func @transform_8(%arg0: i32) -> (i32, i32) {
    %c0_i32 = arith.constant 0 : i32
    %c0_i32_0 = arith.constant 0 : i32
    %c0_i32_1 = arith.constant 0 : i32
    return %c0_i32, %c0_i32_0 : i32, i32
  }
  func.func @transform_9(%arg0: i32) -> (i32, i32) {
    %c0_i32 = arith.constant 0 : i32
    %c0_i32_0 = arith.constant 0 : i32
    return %c0_i32, %arg0 : i32, i32
  }
}

</mosaic_0001>

<llo_original>
// kernel: tpu_custom_call.1
$region0: #{tpu_custom_call.1}
  #allocation0 [shape = 'u32[]', space=smem, size = 0x4, offset = 0x4, fixed_abs, tag = 'smem constant byte address 0x4 - core index']
  #allocation1 [shape = 'u32[144,128]{1,0:T(1,128)}', space=vmem, size = 0x12000, scoped, tag = 'internal scratch']
  %s0 = inlined_call_operand.vmem [shape: bf16[128,512], index: 0, kind: input, shape index: {}]
  %s1 = inlined_call_operand.vmem [shape: bf16[128,128], index: 1, kind: input, shape index: {}]
  %s2 = inlined_call_operand.vmem [shape: f32[128,1], index: 2, kind: input, shape index: {}]
  %s3 = inlined_call_operand.vmem [shape: bf16[128,128], index: 3, kind: input, shape index: {}]
  %s4 = inlined_call_operand.vmem [shape: f32[128,1], index: 4, kind: input, shape index: {}]
  %s5 = inlined_call_operand.hbm [shape: bf16[128,128], index: 5, kind: input, shape index: {}]
  %s6 = inlined_call_operand.vmem [shape: f32[128,1], index: 6, kind: input, shape index: {}]
  %s7 = inlined_call_operand.vmem [shape: bf16[8,128], index: 7, kind: input, shape index: {}]
  %s8 = inlined_call_operand.vmem [shape: f32[8,1], index: 8, kind: input, shape index: {}]
  %s9 = inlined_call_operand.hbm [shape: f32[8,512], index: 9, kind: output, shape index: {}]
  %s10 = sld [smem:[#allocation0]]
  $region50: #{tpu_custom_call.1} parent=0
    _
  %s12 = ssub.s32 1, %s10
  %s13 = scalar_select 0, %s12, %s10
  $region1: #{tpu_custom_call.1} parent=0
    #allocation2 [shape = 'u8[32768]{0}', space=vmem, size = 0x8000, scoped, tag = 'input window, operand 5, single buffered']
    #allocation3 [shape = 's32[1]{0}', space=sflag, size = 0x4, scoped, tag = 'scoped memory for tpu_custom_call.1']
    #allocation4 [shape = 's32[1]{0}', space=sflag, size = 0x4, scoped, tag = 'scoped memory for tpu_custom_call.1']
    #allocation5 [shape = 'u8[16384]{0}', space=vmem, size = 0x4000, scoped, tag = 'output window, operand 0, single buffered']
    %14 = vsyncpa [#allocation3], 0
    %15 = vsyncpa [#allocation4], 0
    // Predicated region
    $region2: #{tpu_custom_call.1} parent=1 // pred_check
      _
    $region3: #{tpu_custom_call.1} parent=1 // pred_check_branch
      %17 = sbr.rel (0) target = $region5
    $region4: #{tpu_custom_call.1} parent=1 // pred_region
      _
    $region5: #{tpu_custom_call.1} parent=1 // pred_fallthru
      _
    // Predicated region
    $region6: #{tpu_custom_call.1} parent=1 // pred_check
      _
    $region7: #{tpu_custom_call.1} parent=1 // pred_check_branch
      %19 = sbr.rel (0) target = $region9
    $region8: #{tpu_custom_call.1} parent=1 // pred_region
      _
    $region9: #{tpu_custom_call.1} parent=1 // pred_fallthru
      _
    // Predicated region
    $region10: #{tpu_custom_call.1} parent=1 // pred_check
      _
    $region11: #{tpu_custom_call.1} parent=1 // pred_check_branch
      %21 = sbr.rel (0) target = $region13
    $region12: #{tpu_custom_call.1} parent=1 // pred_region
      _
    $region13: #{tpu_custom_call.1} parent=1 // pred_fallthru
      _
    // Predicated region
    $region14: #{tpu_custom_call.1} parent=1 // pred_check
      _
    $region15: #{tpu_custom_call.1} parent=1 // pred_check_branch
      %23 = sbr.rel (0) target = $region17
    $region16: #{tpu_custom_call.1} parent=1 // pred_region
      _
    $region17: #{tpu_custom_call.1} parent=1 // pred_fallthru
      _
    // Predicated region
    $region18: #{tpu_custom_call.1} parent=1 // pred_check
      _
    $region19: #{tpu_custom_call.1} parent=1 // pred_check_branch
      %25 = sbr.rel (0) target = $region21
    $region20: #{tpu_custom_call.1} parent=1 // pred_region
      _
    $region21: #{tpu_custom_call.1} parent=1 // pred_fallthru
      _
    // Predicated region
    $region22: #{tpu_custom_call.1} parent=1 // pred_check
      _
    $region23: #{tpu_custom_call.1} parent=1 // pred_check_branch
      %27 = sbr.rel (0) target = $region25
    $region24: #{tpu_custom_call.1} parent=1 // pred_region
      %s29 = ssub.s32 1024, 1024
      %30 = vsyncadd [#allocation3], %s29
      %s31 = sshll.u32 [#allocation2], 4
      %s32 = int_to_ptr.vmem [resolvable:$true] %s31
      %37 = dma.hbm_to_vmem [thread:$0]  %s5, 1024, %s32, [#allocation3], 64, 64, 4
    $region25: #{tpu_custom_call.1} parent=1 // pred_fallthru
      _
    // Predicated region
    $region26: #{tpu_custom_call.1} parent=1 // pred_check
      _
    $region27: #{tpu_custom_call.1} parent=1 // pred_check_branch
      %39 = sbr.rel (0) target = $region29
    $region28: #{tpu_custom_call.1} parent=1 // pred_region
      _
    $region29: #{tpu_custom_call.1} parent=1 // pred_fallthru
      _
    // Predicated region
    $region30: #{tpu_custom_call.1} parent=1 // pred_check
      _
    $region31: #{tpu_custom_call.1} parent=1 // pred_check_branch
      %41 = sbr.rel (0) target = $region33
    $region32: #{tpu_custom_call.1} parent=1 // pred_region
      _
    $region33: #{tpu_custom_call.1} parent=1 // pred_fallthru
      _
    // Predicated region
    $region34: #{tpu_custom_call.1} parent=1 // pred_check
      _
    $region35: #{tpu_custom_call.1} parent=1 // pred_check_branch
      %43 = sbr.rel (0) target = $region37
    $region36: #{tpu_custom_call.1} parent=1 // pred_region
      _
    $region37: #{tpu_custom_call.1} parent=1 // pred_fallthru
      _
    // Predicated region
    $region38: #{tpu_custom_call.1} parent=1 // pred_check
      _
    $region39: #{tpu_custom_call.1} parent=1 // pred_check_branch
      %45 = sbr.rel (0) target = $region41
    $region40: #{tpu_custom_call.1} parent=1 // pred_region
      %46 = dma.done [#allocation3], 1024
    $region41: #{tpu_custom_call.1} parent=1 // pred_fallthru
      _
    %v48 = vld [vmem:[%s0] sm:$0xff]
    %v49 = vld [vmem:[%s0 + $0x8] sm:$0xff]
    %v50 = vld [vmem:[%s0 + $0x10] sm:$0xff]
    %v51 = vld [vmem:[%s0 + $0x18] sm:$0xff]
    %v52 = vld [vmem:[%s0 + $0x20] sm:$0xff]
    %v53 = vld [vmem:[%s0 + $0x28] sm:$0xff]
    %v54 = vld [vmem:[%s0 + $0x30] sm:$0xff]
    %v55 = vld [vmem:[%s0 + $0x38] sm:$0xff]
    %v56 = vld [vmem:[%s0 + $0x40] sm:$0xff]
    %v57 = vld [vmem:[%s0 + $0x48] sm:$0xff]
    %v58 = vld [vmem:[%s0 + $0x50] sm:$0xff]
    %v59 = vld [vmem:[%s0 + $0x58] sm:$0xff]
    %v60 = vld [vmem:[%s0 + $0x60] sm:$0xff]
    %v61 = vld [vmem:[%s0 + $0x68] sm:$0xff]
    %v62 = vld [vmem:[%s0 + $0x70] sm:$0xff]
    %v63 = vld [vmem:[%s0 + $0x78] sm:$0xff]
    %v64 = vld [vmem:[%s0 + $0x80] sm:$0xff]
    %v65 = vld [vmem:[%s0 + $0x88] sm:$0xff]
    %v66 = vld [vmem:[%s0 + $0x90] sm:$0xff]
    %v67 = vld [vmem:[%s0 + $0x98] sm:$0xff]
    %v68 = vld [vmem:[%s0 + $0xa0] sm:$0xff]
    %v69 = vld [vmem:[%s0 + $0xa8] sm:$0xff]
    %v70 = vld [vmem:[%s0 + $0xb0] sm:$0xff]
    %v71 = vld [vmem:[%s0 + $0xb8] sm:$0xff]
    %v72 = vld [vmem:[%s0 + $0xc0] sm:$0xff]
    %v73 = vld [vmem:[%s0 + $0xc8] sm:$0xff]
    %v74 = vld [vmem:[%s0 + $0xd0] sm:$0xff]
    %v75 = vld [vmem:[%s0 + $0xd8] sm:$0xff]
    %v76 = vld [vmem:[%s0 + $0xe0] sm:$0xff]
    %v77 = vld [vmem:[%s0 + $0xe8] sm:$0xff]
    %v78 = vld [vmem:[%s0 + $0xf0] sm:$0xff]
    %v79 = vld [vmem:[%s0 + $0xf8] sm:$0xff]
    %v80 = vld [vmem:[%s1] sm:$0xf]
    %v81 = vld [vmem:[%s1 + $0x4] sm:$0xf]
    %v82 = vld [vmem:[%s1 + $0x8] sm:$0xf]
    %v83 = vld [vmem:[%s1 + $0xc] sm:$0xf]
    %v84 = vld [vmem:[%s1 + $0x10] sm:$0xf]
    %v85 = vld [vmem:[%s1 + $0x14] sm:$0xf]
    %v86 = vld [vmem:[%s1 + $0x18] sm:$0xf]
    %v87 = vld [vmem:[%s1 + $0x1c] sm:$0xf]
    %v88 = vld [vmem:[%s1 + $0x20] sm:$0xf]
    %v89 = vld [vmem:[%s1 + $0x24] sm:$0xf]
    %v90 = vld [vmem:[%s1 + $0x28] sm:$0xf]
    %v91 = vld [vmem:[%s1 + $0x2c] sm:$0xf]
    %v92 = vld [vmem:[%s1 + $0x30] sm:$0xf]
    %v93 = vld [vmem:[%s1 + $0x34] sm:$0xf]
    %v94 = vld [vmem:[%s1 + $0x38] sm:$0xf]
    %v95 = vld [vmem:[%s1 + $0x3c] sm:$0xf]
    %v96 = vld [vmem:[%s2] sm:$0xff]
    %v97 = vld [vmem:[%s2 + $0x8] sm:$0xff]
    %v98 = vld [vmem:[%s2 + $0x10] sm:$0xff]
    %v99 = vld [vmem:[%s2 + $0x18] sm:$0xff]
    %v100 = vld [vmem:[%s2 + $0x20] sm:$0xff]
    %v101 = vld [vmem:[%s2 + $0x28] sm:$0xff]
    %v102 = vld [vmem:[%s2 + $0x30] sm:$0xff]
    %v103 = vld [vmem:[%s2 + $0x38] sm:$0xff]
    %v104 = vld [vmem:[%s2 + $0x40] sm:$0xff]
    %v105 = vld [vmem:[%s2 + $0x48] sm:$0xff]
    %v106 = vld [vmem:[%s2 + $0x50] sm:$0xff]
    %v107 = vld [vmem:[%s2 + $0x58] sm:$0xff]
    %v108 = vld [vmem:[%s2 + $0x60] sm:$0xff]
    %v109 = vld [vmem:[%s2 + $0x68] sm:$0xff]
    %v110 = vld [vmem:[%s2 + $0x70] sm:$0xff]
    %v111 = vld [vmem:[%s2 + $0x78] sm:$0xff]
    %113 = vset.pattern.permute.xlu0 0
    %114 = vperm.xlu0 %113, %v96
    %v115 = vpop.permute.xlu0 %114
    %118 = vset.pattern.permute.xlu0 0
    %119 = vperm.xlu0 %118, %v97
    %v120 = vpop.permute.xlu0 %119
    %123 = vset.pattern.permute.xlu0 0
    %124 = vperm.xlu0 %123, %v98
    %v125 = vpop.permute.xlu0 %124
    %128 = vset.pattern.permute.xlu0 0
    %129 = vperm.xlu0 %128, %v99
    %v130 = vpop.permute.xlu0 %129
    %133 = vset.pattern.permute.xlu0 0
    %134 = vperm.xlu0 %133, %v100
    %v135 = vpop.permute.xlu0 %134
    %138 = vset.pattern.permute.xlu0 0
    %139 = vperm.xlu0 %138, %v101
    %v140 = vpop.permute.xlu0 %139
    %143 = vset.pattern.permute.xlu0 0
    %144 = vperm.xlu0 %143, %v102
    %v145 = vpop.permute.xlu0 %144
    %148 = vset.pattern.permute.xlu0 0
    %149 = vperm.xlu0 %148, %v103
    %v150 = vpop.permute.xlu0 %149
    %153 = vset.pattern.permute.xlu0 0
    %154 = vperm.xlu0 %153, %v104
    %v155 = vpop.permute.xlu0 %154
    %158 = vset.pattern.permute.xlu0 0
    %159 = vperm.xlu0 %158, %v105
    %v160 = vpop.permute.xlu0 %159
    %163 = vset.pattern.permute.xlu0 0
    %164 = vperm.xlu0 %163, %v106
    %v165 = vpop.permute.xlu0 %164
    %168 = vset.pattern.permute.xlu0 0
    %169 = vperm.xlu0 %168, %v107
    %v170 = vpop.permute.xlu0 %169
    %173 = vset.pattern.permute.xlu0 0
    %174 = vperm.xlu0 %173, %v108
    %v175 = vpop.permute.xlu0 %174
    %178 = vset.pattern.permute.xlu0 0
    %179 = vperm.xlu0 %178, %v109
    %v180 = vpop.permute.xlu0 %179
    %183 = vset.pattern.permute.xlu0 0
    %184 = vperm.xlu0 %183, %v110
    %v185 = vpop.permute.xlu0 %184
    %188 = vset.pattern.permute.xlu0 0
    %189 = vperm.xlu0 %188, %v111
    %v190 = vpop.permute.xlu0 %189
    %v208 = vunpack.c.l.b16 %v80
    %v209 = vunpack.c.l.b16 %v81
    %v210 = vunpack.c.l.b16 %v82
    %v211 = vunpack.c.l.b16 %v83
    %v212 = vunpack.c.l.b16 %v84
    %v213 = vunpack.c.l.b16 %v85
    %v214 = vunpack.c.l.b16 %v86
    %v215 = vunpack.c.l.b16 %v87
    %v216 = vunpack.c.l.b16 %v88
    %v217 = vunpack.c.l.b16 %v89
    %v218 = vunpack.c.l.b16 %v90
    %v219 = vunpack.c.l.b16 %v91
    %v220 = vunpack.c.l.b16 %v92
    %v221 = vunpack.c.l.b16 %v93
    %v222 = vunpack.c.l.b16 %v94
    %v223 = vunpack.c.l.b16 %v95
    %v224 = vpack.c.b16 %v209, %v208
    %v225 = vpack.c.b16 %v211, %v210
    %v226 = vpack.c.b16 %v213, %v212
    %v227 = vpack.c.b16 %v215, %v214
    %v228 = vpack.c.b16 %v217, %v216
    %v229 = vpack.c.b16 %v219, %v218
    %v230 = vpack.c.b16 %v221, %v220
    %v231 = vpack.c.b16 %v223, %v222
    %v272 = vunpack.c.l.b16 %v48
    %v273 = vunpack.c.h.b16 %v48
    %v274 = vunpack.c.l.b16 %v49
    %v275 = vunpack.c.h.b16 %v49
    %v276 = vunpack.c.l.b16 %v50
    %v277 = vunpack.c.h.b16 %v50
    %v278 = vunpack.c.l.b16 %v51
    %v279 = vunpack.c.h.b16 %v51
    %v280 = vunpack.c.l.b16 %v52
    %v281 = vunpack.c.h.b16 %v52
    %v282 = vunpack.c.l.b16 %v53
    %v283 = vunpack.c.h.b16 %v53
    %v284 = vunpack.c.l.b16 %v54
    %v285 = vunpack.c.h.b16 %v54
    %v286 = vunpack.c.l.b16 %v55
    %v287 = vunpack.c.h.b16 %v55
    %v288 = vunpack.c.l.b16 %v56
    %v289 = vunpack.c.h.b16 %v56
    %v290 = vunpack.c.l.b16 %v57
    %v291 = vunpack.c.h.b16 %v57
    %v292 = vunpack.c.l.b16 %v58
    %v293 = vunpack.c.h.b16 %v58
    %v294 = vunpack.c.l.b16 %v59
    %v295 = vunpack.c.h.b16 %v59
    %v296 = vunpack.c.l.b16 %v60
    %v297 = vunpack.c.h.b16 %v60
    %v298 = vunpack.c.l.b16 %v61
    %v299 = vunpack.c.h.b16 %v61
    %v300 = vunpack.c.l.b16 %v62
    %v301 = vunpack.c.h.b16 %v62
    %v302 = vunpack.c.l.b16 %v63
    %v303 = vunpack.c.h.b16 %v63
    %v304 = vunpack.c.l.b16 %v64
    %v305 = vunpack.c.h.b16 %v64
    %v306 = vunpack.c.l.b16 %v65
    %v307 = vunpack.c.h.b16 %v65
    %v308 = vunpack.c.l.b16 %v66
    %v309 = vunpack.c.h.b16 %v66
    %v310 = vunpack.c.l.b16 %v67
    %v311 = vunpack.c.h.b16 %v67
    %v312 = vunpack.c.l.b16 %v68
    %v313 = vunpack.c.h.b16 %v68
    %v314 = vunpack.c.l.b16 %v69
    %v315 = vunpack.c.h.b16 %v69
    %v316 = vunpack.c.l.b16 %v70
    %v317 = vunpack.c.h.b16 %v70
    %v318 = vunpack.c.l.b16 %v71
    %v319 = vunpack.c.h.b16 %v71
    %v320 = vunpack.c.l.b16 %v72
    %v321 = vunpack.c.h.b16 %v72
    %v322 = vunpack.c.l.b16 %v73
    %v323 = vunpack.c.h.b16 %v73
    %v324 = vunpack.c.l.b16 %v74
    %v325 = vunpack.c.h.b16 %v74
    %v326 = vunpack.c.l.b16 %v75
    %v327 = vunpack.c.h.b16 %v75
    %v328 = vunpack.c.l.b16 %v76
    %v329 = vunpack.c.h.b16 %v76
    %v330 = vunpack.c.l.b16 %v77
    %v331 = vunpack.c.h.b16 %v77
    %v332 = vunpack.c.l.b16 %v78
    %v333 = vunpack.c.h.b16 %v78
    %v334 = vunpack.c.l.b16 %v79
    %v335 = vunpack.c.h.b16 %v79
    %v336 = vpack.c.b16 %v276, %v272
    %v337 = vpack.c.b16 %v277, %v273
    %v338 = vpack.c.b16 %v278, %v274
    %v339 = vpack.c.b16 %v279, %v275
    %v340 = vpack.c.b16 %v284, %v280
    %v341 = vpack.c.b16 %v285, %v281
    %v342 = vpack.c.b16 %v286, %v282
    %v343 = vpack.c.b16 %v287, %v283
    %v344 = vpack.c.b16 %v292, %v288
    %v345 = vpack.c.b16 %v293, %v289
    %v346 = vpack.c.b16 %v294, %v290
    %v347 = vpack.c.b16 %v295, %v291
    %v348 = vpack.c.b16 %v300, %v296
    %v349 = vpack.c.b16 %v301, %v297
    %v350 = vpack.c.b16 %v302, %v298
    %v351 = vpack.c.b16 %v303, %v299
    %v352 = vpack.c.b16 %v308, %v304
    %v353 = vpack.c.b16 %v309, %v305
    %v354 = vpack.c.b16 %v310, %v306
    %v355 = vpack.c.b16 %v311, %v307
    %v356 = vpack.c.b16 %v316, %v312
    %v357 = vpack.c.b16 %v317, %v313
    %v358 = vpack.c.b16 %v318, %v314
    %v359 = vpack.c.b16 %v319, %v315
    %v360 = vpack.c.b16 %v324, %v320
    %v361 = vpack.c.b16 %v325, %v321
    %v362 = vpack.c.b16 %v326, %v322
    %v363 = vpack.c.b16 %v327, %v323
    %v364 = vpack.c.b16 %v332, %v328
    %v365 = vpack.c.b16 %v333, %v329
    %v366 = vpack.c.b16 %v334, %v330
    %v367 = vpack.c.b16 %v335, %v331
    %400 = vmatprep.subr.bf16.mxu0 %v365
    %401 = vmatpush1.bf16.msra.mxu0 %v364
    %402 = vmatprep.subr.bf16.mxu0 %v361
    %403 = vmatpush1.bf16.msra.mxu0 %v360
    %404 = vmatprep.subr.bf16.mxu0 %v357
    %405 = vmatpush1.bf16.msra.mxu0 %v356
    %406 = vmatprep.subr.bf16.mxu0 %v353
    %407 = vmatpush1.bf16.msra.mxu0 %v352
    %408 = vmatprep.subr.bf16.mxu0 %v349
    %409 = vmatpush1.bf16.msra.mxu0 %v348
    %410 = vmatprep.subr.bf16.mxu0 %v345
    %411 = vmatpush1.bf16.msra.mxu0 %v344
    %412 = vmatprep.subr.bf16.mxu0 %v341
    %413 = vmatpush1.bf16.msra.mxu0 %v340
    %414 = vmatprep.subr.bf16.mxu0 %v337
    %415 = vmatpush1.bf16.msra.mxu0 %v336
    %416 = vmatprep.subr.bf16.mxu0 0
    %417 = vmatpush2.bf16.msra.mxu0 0
    %418 = vmatprep.subr.bf16.mxu0 0
    %419 = vmatpush2.bf16.msra.mxu0 0
    %420 = vmatprep.subr.bf16.mxu0 0
    %421 = vmatpush2.bf16.msra.mxu0 0
    %422 = vmatprep.subr.bf16.mxu0 0
    %423 = vmatpush2.bf16.msra.mxu0 0
    %424 = vmatprep.subr.bf16.mxu0 0
    %425 = vmatpush2.bf16.msra.mxu0 0
    %426 = vmatprep.subr.bf16.mxu0 0
    %427 = vmatpush2.bf16.msra.mxu0 0
    %428 = vmatprep.subr.bf16.mxu0 0
    %429 = vmatpush2.bf16.msra.mxu0 0
    %430 = vmatprep.subr.bf16.mxu0 0
    %431 = vmatpush2.bf16.msra.mxu0 0
    %432 = vmatprep.mubr.bf16.mxu0 0
    %433 = vmatmul.mubr.bf16.gmra.mxu0 %v224
    %v434 = vpop.f32.mrf.mxu0
    %v435 = vadd.f32 %v115, %v434
    %v436 = vpop.f32.mrf.mxu0
    %v437 = vadd.f32 %v115, %v436
    %v438 = vpop.f32.mrf.mxu0
    %v439 = vadd.f32 %v120, %v438
    %v440 = vpop.f32.mrf.mxu0
    %v441 = vadd.f32 %v120, %v440
    %442 = vmatprep.mubr.bf16.mxu0 0
    %443 = vmatmul.mubr.bf16.gmra.mxu0 %v225
    %v444 = vpop.f32.mrf.mxu0
    %v445 = vadd.f32 %v125, %v444
    %v446 = vpop.f32.mrf.mxu0
    %v447 = vadd.f32 %v125, %v446
    %v448 = vpop.f32.mrf.mxu0
    %v449 = vadd.f32 %v130, %v448
    %v450 = vpop.f32.mrf.mxu0
    %v451 = vadd.f32 %v130, %v450
    %452 = vmatprep.mubr.bf16.mxu0 0
    %453 = vmatmul.mubr.bf16.gmra.mxu0 %v226
    %v454 = vpop.f32.mrf.mxu0
    %v455 = vadd.f32 %v135, %v454
    %v456 = vpop.f32.mrf.mxu0
    %v457 = vadd.f32 %v135, %v456
    %v458 = vpop.f32.mrf.mxu0
    %v459 = vadd.f32 %v140, %v458
    %v460 = vpop.f32.mrf.mxu0
    %v461 = vadd.f32 %v140, %v460
    %462 = vmatprep.mubr.bf16.mxu0 0
    %463 = vmatmul.mubr.bf16.gmra.mxu0 %v227
    %v464 = vpop.f32.mrf.mxu0
    %v465 = vadd.f32 %v145, %v464
    %v466 = vpop.f32.mrf.mxu0
    %v467 = vadd.f32 %v145, %v466
    %v468 = vpop.f32.mrf.mxu0
    %v469 = vadd.f32 %v150, %v468
    %v470 = vpop.f32.mrf.mxu0
    %v471 = vadd.f32 %v150, %v470
    %472 = vmatprep.mubr.bf16.mxu0 0
    %473 = vmatmul.mubr.bf16.gmra.mxu0 %v228
    %v474 = vpop.f32.mrf.mxu0
    %v475 = vadd.f32 %v155, %v474
    %v476 = vpop.f32.mrf.mxu0
    %v477 = vadd.f32 %v155, %v476
    %v478 = vpop.f32.mrf.mxu0
    %v479 = vadd.f32 %v160, %v478
    %v480 = vpop.f32.mrf.mxu0
    %v481 = vadd.f32 %v160, %v480
    %482 = vmatprep.mubr.bf16.mxu0 0
    %483 = vmatmul.mubr.bf16.gmra.mxu0 %v229
    %v484 = vpop.f32.mrf.mxu0
    %v485 = vadd.f32 %v165, %v484
    %v486 = vpop.f32.mrf.mxu0
    %v487 = vadd.f32 %v165, %v486
    %v488 = vpop.f32.mrf.mxu0
    %v489 = vadd.f32 %v170, %v488
    %v490 = vpop.f32.mrf.mxu0
    %v491 = vadd.f32 %v170, %v490
    %492 = vmatprep.mubr.bf16.mxu0 0
    %493 = vmatmul.mubr.bf16.gmra.mxu0 %v230
    %v494 = vpop.f32.mrf.mxu0
    %v495 = vadd.f32 %v175, %v494
    %v496 = vpop.f32.mrf.mxu0
    %v497 = vadd.f32 %v175, %v496
    %v498 = vpop.f32.mrf.mxu0
    %v499 = vadd.f32 %v180, %v498
    %v500 = vpop.f32.mrf.mxu0
    %v501 = vadd.f32 %v180, %v500
    %502 = vmatprep.mubr.bf16.mxu0 0
    %503 = vmatmul.mubr.bf16.gmra.mxu0 %v231
    %v504 = vpop.f32.mrf.mxu0
    %v505 = vadd.f32 %v185, %v504
    %v506 = vpop.f32.mrf.mxu0
    %v507 = vadd.f32 %v185, %v506
    %v508 = vpop.f32.mrf.mxu0
    %v509 = vadd.f32 %v190, %v508
    %v510 = vpop.f32.mrf.mxu0
    %v511 = vadd.f32 %v190, %v510
    %512 = vdwg.mxu0
    %513 = vmatprep.subr.bf16.mxu0 %v367
    %514 = vmatpush1.bf16.msra.mxu0 %v366
    %515 = vmatprep.subr.bf16.mxu0 %v363
    %516 = vmatpush1.bf16.msra.mxu0 %v362
    %517 = vmatprep.subr.bf16.mxu0 %v359
    %518 = vmatpush1.bf16.msra.mxu0 %v358
    %519 = vmatprep.subr.bf16.mxu0 %v355
    %520 = vmatpush1.bf16.msra.mxu0 %v354
    %521 = vmatprep.subr.bf16.mxu0 %v351
    %522 = vmatpush1.bf16.msra.mxu0 %v350
    %523 = vmatprep.subr.bf16.mxu0 %v347
    %524 = vmatpush1.bf16.msra.mxu0 %v346
    %525 = vmatprep.subr.bf16.mxu0 %v343
    %526 = vmatpush1.bf16.msra.mxu0 %v342
    %527 = vmatprep.subr.bf16.mxu0 %v339
    %528 = vmatpush1.bf16.msra.mxu0 %v338
    %529 = vmatprep.subr.bf16.mxu0 0
    %530 = vmatpush2.bf16.msra.mxu0 0
    %531 = vmatprep.subr.bf16.mxu0 0
    %532 = vmatpush2.bf16.msra.mxu0 0
    %533 = vmatprep.subr.bf16.mxu0 0
    %534 = vmatpush2.bf16.msra.mxu0 0
    %535 = vmatprep.subr.bf16.mxu0 0
    %536 = vmatpush2.bf16.msra.mxu0 0
    %537 = vmatprep.subr.bf16.mxu0 0
    %538 = vmatpush2.bf16.msra.mxu0 0
    %539 = vmatprep.subr.bf16.mxu0 0
    %540 = vmatpush2.bf16.msra.mxu0 0
    %541 = vmatprep.subr.bf16.mxu0 0
    %542 = vmatpush2.bf16.msra.mxu0 0
    %543 = vmatprep.subr.bf16.mxu0 0
    %544 = vmatpush2.bf16.msra.mxu0 0
    %545 = vmatprep.mubr.bf16.mxu0 0
    %546 = vmatmul.mubr.bf16.gmra.mxu0 %v224
    %v547 = vpop.f32.mrf.mxu0
    %v548 = vadd.f32 %v115, %v547
    %v549 = vpop.f32.mrf.mxu0
    %v550 = vadd.f32 %v115, %v549
    %v551 = vpop.f32.mrf.mxu0
    %v552 = vadd.f32 %v120, %v551
    %v553 = vpop.f32.mrf.mxu0
    %v554 = vadd.f32 %v120, %v553
    %555 = vmatprep.mubr.bf16.mxu0 0
    %556 = vmatmul.mubr.bf16.gmra.mxu0 %v225
    %v557 = vpop.f32.mrf.mxu0
    %v558 = vadd.f32 %v125, %v557
    %v559 = vpop.f32.mrf.mxu0
    %v560 = vadd.f32 %v125, %v559
    %v561 = vpop.f32.mrf.mxu0
    %v562 = vadd.f32 %v130, %v561
    %v563 = vpop.f32.mrf.mxu0
    %v564 = vadd.f32 %v130, %v563
    %565 = vmatprep.mubr.bf16.mxu0 0
    %566 = vmatmul.mubr.bf16.gmra.mxu0 %v226
    %v567 = vpop.f32.mrf.mxu0
    %v568 = vadd.f32 %v135, %v567
    %v569 = vpop.f32.mrf.mxu0
    %v570 = vadd.f32 %v135, %v569
    %v571 = vpop.f32.mrf.mxu0
    %v572 = vadd.f32 %v140, %v571
    %v573 = vpop.f32.mrf.mxu0
    %v574 = vadd.f32 %v140, %v573
    %575 = vmatprep.mubr.bf16.mxu0 0
    %576 = vmatmul.mubr.bf16.gmra.mxu0 %v227
    %v577 = vpop.f32.mrf.mxu0
    %v578 = vadd.f32 %v145, %v577
    %v579 = vpop.f32.mrf.mxu0
    %v580 = vadd.f32 %v145, %v579
    %v581 = vpop.f32.mrf.mxu0
    %v582 = vadd.f32 %v150, %v581
    %v583 = vpop.f32.mrf.mxu0
    %v584 = vadd.f32 %v150, %v583
    %585 = vmatprep.mubr.bf16.mxu0 0
    %586 = vmatmul.mubr.bf16.gmra.mxu0 %v228
    %v587 = vpop.f32.mrf.mxu0
    %v588 = vadd.f32 %v155, %v587
    %v589 = vpop.f32.mrf.mxu0
    %v590 = vadd.f32 %v155, %v589
    %v591 = vpop.f32.mrf.mxu0
    %v592 = vadd.f32 %v160, %v591
    %v593 = vpop.f32.mrf.mxu0
    %v594 = vadd.f32 %v160, %v593
    %595 = vmatprep.mubr.bf16.mxu0 0
    %596 = vmatmul.mubr.bf16.gmra.mxu0 %v229
    %v597 = vpop.f32.mrf.mxu0
    %v598 = vadd.f32 %v165, %v597
    %v599 = vpop.f32.mrf.mxu0
    %v600 = vadd.f32 %v165, %v599
    %v601 = vpop.f32.mrf.mxu0
    %v602 = vadd.f32 %v170, %v601
    %v603 = vpop.f32.mrf.mxu0
    %v604 = vadd.f32 %v170, %v603
    %605 = vmatprep.mubr.bf16.mxu0 0
    %606 = vmatmul.mubr.bf16.gmra.mxu0 %v230
    %v607 = vpop.f32.mrf.mxu0
    %v608 = vadd.f32 %v175, %v607
    %v609 = vpop.f32.mrf.mxu0
    %v610 = vadd.f32 %v175, %v609
    %v611 = vpop.f32.mrf.mxu0
    %v612 = vadd.f32 %v180, %v611
    %v613 = vpop.f32.mrf.mxu0
    %v614 = vadd.f32 %v180, %v613
    %615 = vmatprep.mubr.bf16.mxu0 0
    %616 = vmatmul.mubr.bf16.gmra.mxu0 %v231
    %v617 = vpop.f32.mrf.mxu0
    %v618 = vadd.f32 %v185, %v617
    %v619 = vpop.f32.mrf.mxu0
    %v620 = vadd.f32 %v185, %v619
    %v621 = vpop.f32.mrf.mxu0
    %v622 = vadd.f32 %v190, %v621
    %v623 = vpop.f32.mrf.mxu0
    %v624 = vadd.f32 %v190, %v623
    %625 = vdwg.mxu0
    %v626 = vmax.f32 %v435, 0.0
    %v627 = vmax.f32 %v437, 0.0
    %v628 = vmax.f32 %v548, 0.0
    %v629 = vmax.f32 %v550, 0.0
    %v630 = vmax.f32 %v439, 0.0
    %v631 = vmax.f32 %v441, 0.0
    %v632 = vmax.f32 %v552, 0.0
    %v633 = vmax.f32 %v554, 0.0
    %v634 = vmax.f32 %v445, 0.0
    %v635 = vmax.f32 %v447, 0.0
    %v636 = vmax.f32 %v558, 0.0
    %v637 = vmax.f32 %v560, 0.0
    %v638 = vmax.f32 %v449, 0.0
    %v639 = vmax.f32 %v451, 0.0
    %v640 = vmax.f32 %v562, 0.0
    %v641 = vmax.f32 %v564, 0.0
    %v642 = vmax.f32 %v455, 0.0
    %v643 = vmax.f32 %v457, 0.0
    %v644 = vmax.f32 %v568, 0.0
    %v645 = vmax.f32 %v570, 0.0
    %v646 = vmax.f32 %v459, 0.0
    %v647 = vmax.f32 %v461, 0.0
    %v648 = vmax.f32 %v572, 0.0
    %v649 = vmax.f32 %v574, 0.0
    %v650 = vmax.f32 %v465, 0.0
    %v651 = vmax.f32 %v467, 0.0
    %v652 = vmax.f32 %v578, 0.0
    %v653 = vmax.f32 %v580, 0.0
    %v654 = vmax.f32 %v469, 0.0
    %v655 = vmax.f32 %v471, 0.0
    %v656 = vmax.f32 %v582, 0.0
    %v657 = vmax.f32 %v584, 0.0
    %v658 = vmax.f32 %v475, 0.0
    %v659 = vmax.f32 %v477, 0.0
    %v660 = vmax.f32 %v588, 0.0
    %v661 = vmax.f32 %v590, 0.0
    %v662 = vmax.f32 %v479, 0.0
    %v663 = vmax.f32 %v481, 0.0
    %v664 = vmax.f32 %v592, 0.0
    %v665 = vmax.f32 %v594, 0.0
    %v666 = vmax.f32 %v485, 0.0
    %v667 = vmax.f32 %v487, 0.0
    %v668 = vmax.f32 %v598, 0.0
    %v669 = vmax.f32 %v600, 0.0
    %v670 = vmax.f32 %v489, 0.0
    %v671 = vmax.f32 %v491, 0.0
    %v672 = vmax.f32 %v602, 0.0
    %v673 = vmax.f32 %v604, 0.0
    %v674 = vmax.f32 %v495, 0.0
    %v675 = vmax.f32 %v497, 0.0
    %v676 = vmax.f32 %v608, 0.0
    %v677 = vmax.f32 %v610, 0.0
    %v678 = vmax.f32 %v499, 0.0
    %v679 = vmax.f32 %v501, 0.0
    %v680 = vmax.f32 %v612, 0.0
    %v681 = vmax.f32 %v614, 0.0
    %v682 = vmax.f32 %v505, 0.0
    %v683 = vmax.f32 %v507, 0.0
    %v684 = vmax.f32 %v618, 0.0
    %v685 = vmax.f32 %v620, 0.0
    %v686 = vmax.f32 %v509, 0.0
    %v687 = vmax.f32 %v511, 0.0
    %v688 = vmax.f32 %v622, 0.0
    %v689 = vmax.f32 %v624, 0.0
    %v690 = vpack.c.bf16 %v630, %v626
    %v691 = vpack.c.bf16 %v631, %v627
    %v692 = vpack.c.bf16 %v632, %v628
    %v693 = vpack.c.bf16 %v633, %v629
    %v694 = vpack.c.bf16 %v638, %v634
    %v695 = vpack.c.bf16 %v639, %v635
    %v696 = vpack.c.bf16 %v640, %v636
    %v697 = vpack.c.bf16 %v641, %v637
    %v698 = vpack.c.bf16 %v646, %v642
    %v699 = vpack.c.bf16 %v647, %v643
    %v700 = vpack.c.bf16 %v648, %v644
    %v701 = vpack.c.bf16 %v649, %v645
    %v702 = vpack.c.bf16 %v654, %v650
    %v703 = vpack.c.bf16 %v655, %v651
    %v704 = vpack.c.bf16 %v656, %v652
    %v705 = vpack.c.bf16 %v657, %v653
    %v706 = vpack.c.bf16 %v662, %v658
    %v707 = vpack.c.bf16 %v663, %v659
    %v708 = vpack.c.bf16 %v664, %v660
    %v709 = vpack.c.bf16 %v665, %v661
    %v710 = vpack.c.bf16 %v670, %v666
    %v711 = vpack.c.bf16 %v671, %v667
    %v712 = vpack.c.bf16 %v672, %v668
    %v713 = vpack.c.bf16 %v673, %v669
    %v714 = vpack.c.bf16 %v678, %v674
    %v715 = vpack.c.bf16 %v679, %v675
    %v716 = vpack.c.bf16 %v680, %v676
    %v717 = vpack.c.bf16 %v681, %v677
    %v718 = vpack.c.bf16 %v686, %v682
    %v719 = vpack.c.bf16 %v687, %v683
    %v720 = vpack.c.bf16 %v688, %v684
    %v721 = vpack.c.bf16 %v689, %v685
    %v722 = vld [vmem:[%s3] sm:$0xf]
    %v723 = vld [vmem:[%s3 + $0x4] sm:$0xf]
    %v724 = vld [vmem:[%s3 + $0x8] sm:$0xf]
    %v725 = vld [vmem:[%s3 + $0xc] sm:$0xf]
    %v726 = vld [vmem:[%s3 + $0x10] sm:$0xf]
    %v727 = vld [vmem:[%s3 + $0x14] sm:$0xf]
    %v728 = vld [vmem:[%s3 + $0x18] sm:$0xf]
    %v729 = vld [vmem:[%s3 + $0x1c] sm:$0xf]
    %v730 = vld [vmem:[%s3 + $0x20] sm:$0xf]
    %v731 = vld [vmem:[%s3 + $0x24] sm:$0xf]
    %v732 = vld [vmem:[%s3 + $0x28] sm:$0xf]
    %v733 = vld [vmem:[%s3 + $0x2c] sm:$0xf]
    %v734 = vld [vmem:[%s3 + $0x30] sm:$0xf]
    %v735 = vld [vmem:[%s3 + $0x34] sm:$0xf]
    %v736 = vld [vmem:[%s3 + $0x38] sm:$0xf]
    %v737 = vld [vmem:[%s3 + $0x3c] sm:$0xf]
    %v738 = vld [vmem:[%s4] sm:$0xff]
    %v739 = vld [vmem:[%s4 + $0x8] sm:$0xff]
    %v740 = vld [vmem:[%s4 + $0x10] sm:$0xff]
    %v741 = vld [vmem:[%s4 + $0x18] sm:$0xff]
    %v742 = vld [vmem:[%s4 + $0x20] sm:$0xff]
    %v743 = vld [vmem:[%s4 + $0x28] sm:$0xff]
    %v744 = vld [vmem:[%s4 + $0x30] sm:$0xff]
    %v745 = vld [vmem:[%s4 + $0x38] sm:$0xff]
    %v746 = vld [vmem:[%s4 + $0x40] sm:$0xff]
    %v747 = vld [vmem:[%s4 + $0x48] sm:$0xff]
    %v748 = vld [vmem:[%s4 + $0x50] sm:$0xff]
    %v749 = vld [vmem:[%s4 + $0x58] sm:$0xff]
    %v750 = vld [vmem:[%s4 + $0x60] sm:$0xff]
    %v751 = vld [vmem:[%s4 + $0x68] sm:$0xff]
    %v752 = vld [vmem:[%s4 + $0x70] sm:$0xff]
    %v753 = vld [vmem:[%s4 + $0x78] sm:$0xff]
    %755 = vset.pattern.permute.xlu0 0
    %756 = vperm.xlu0 %755, %v738
    %v757 = vpop.permute.xlu0 %756
    %760 = vset.pattern.permute.xlu0 0
    %761 = vperm.xlu0 %760, %v739
    %v762 = vpop.permute.xlu0 %761
    %765 = vset.pattern.permute.xlu0 0
    %766 = vperm.xlu0 %765, %v740
    %v767 = vpop.permute.xlu0 %766
    %770 = vset.pattern.permute.xlu0 0
    %771 = vperm.xlu0 %770, %v741
    %v772 = vpop.permute.xlu0 %771
    %775 = vset.pattern.permute.xlu0 0
    %776 = vperm.xlu0 %775, %v742
    %v777 = vpop.permute.xlu0 %776
    %780 = vset.pattern.permute.xlu0 0
    %781 = vperm.xlu0 %780, %v743
    %v782 = vpop.permute.xlu0 %781
    %785 = vset.pattern.permute.xlu0 0
    %786 = vperm.xlu0 %785, %v744
    %v787 = vpop.permute.xlu0 %786
    %790 = vset.pattern.permute.xlu0 0
    %791 = vperm.xlu0 %790, %v745
    %v792 = vpop.permute.xlu0 %791
    %795 = vset.pattern.permute.xlu0 0
    %796 = vperm.xlu0 %795, %v746
    %v797 = vpop.permute.xlu0 %796
    %800 = vset.pattern.permute.xlu0 0
    %801 = vperm.xlu0 %800, %v747
    %v802 = vpop.permute.xlu0 %801
    %805 = vset.pattern.permute.xlu0 0
    %806 = vperm.xlu0 %805, %v748
    %v807 = vpop.permute.xlu0 %806
    %810 = vset.pattern.permute.xlu0 0
    %811 = vperm.xlu0 %810, %v749
    %v812 = vpop.permute.xlu0 %811
    %815 = vset.pattern.permute.xlu0 0
    %816 = vperm.xlu0 %815, %v750
    %v817 = vpop.permute.xlu0 %816
    %820 = vset.pattern.permute.xlu0 0
    %821 = vperm.xlu0 %820, %v751
    %v822 = vpop.permute.xlu0 %821
    %825 = vset.pattern.permute.xlu0 0
    %826 = vperm.xlu0 %825, %v752
    %v827 = vpop.permute.xlu0 %826
    %830 = vset.pattern.permute.xlu0 0
    %831 = vperm.xlu0 %830, %v753
    %v832 = vpop.permute.xlu0 %831
    %v850 = vunpack.c.l.b16 %v722
    %v851 = vunpack.c.l.b16 %v723
    %v852 = vunpack.c.l.b16 %v724
    %v853 = vunpack.c.l.b16 %v725
    %v854 = vunpack.c.l.b16 %v726
    %v855 = vunpack.c.l.b16 %v727
    %v856 = vunpack.c.l.b16 %v728
    %v857 = vunpack.c.l.b16 %v729
    %v858 = vunpack.c.l.b16 %v730
    %v859 = vunpack.c.l.b16 %v731
    %v860 = vunpack.c.l.b16 %v732
    %v861 = vunpack.c.l.b16 %v733
    %v862 = vunpack.c.l.b16 %v734
    %v863 = vunpack.c.l.b16 %v735
    %v864 = vunpack.c.l.b16 %v736
    %v865 = vunpack.c.l.b16 %v737
    %v866 = vpack.c.b16 %v851, %v850
    %v867 = vpack.c.b16 %v853, %v852
    %v868 = vpack.c.b16 %v855, %v854
    %v869 = vpack.c.b16 %v857, %v856
    %v870 = vpack.c.b16 %v859, %v858
    %v871 = vpack.c.b16 %v861, %v860
    %v872 = vpack.c.b16 %v863, %v862
    %v873 = vpack.c.b16 %v865, %v864
    %882 = vmatprep.subr.bf16.mxu0 %v719
    %883 = vmatpush1.bf16.msra.mxu0 %v718
    %884 = vmatprep.subr.bf16.mxu0 %v715
    %885 = vmatpush1.bf16.msra.mxu0 %v714
    %886 = vmatprep.subr.bf16.mxu0 %v711
    %887 = vmatpush1.bf16.msra.mxu0 %v710
    %888 = vmatprep.subr.bf16.mxu0 %v707
    %889 = vmatpush1.bf16.msra.mxu0 %v706
    %890 = vmatprep.subr.bf16.mxu0 %v703
    %891 = vmatpush1.bf16.msra.mxu0 %v702
    %892 = vmatprep.subr.bf16.mxu0 %v699
    %893 = vmatpush1.bf16.msra.mxu0 %v698
    %894 = vmatprep.subr.bf16.mxu0 %v695
    %895 = vmatpush1.bf16.msra.mxu0 %v694
    %896 = vmatprep.subr.bf16.mxu0 %v691
    %897 = vmatpush1.bf16.msra.mxu0 %v690
    %898 = vmatprep.subr.bf16.mxu0 0
    %899 = vmatpush2.bf16.msra.mxu0 0
    %900 = vmatprep.subr.bf16.mxu0 0
    %901 = vmatpush2.bf16.msra.mxu0 0
    %902 = vmatprep.subr.bf16.mxu0 0
    %903 = vmatpush2.bf16.msra.mxu0 0
    %904 = vmatprep.subr.bf16.mxu0 0
    %905 = vmatpush2.bf16.msra.mxu0 0
    %906 = vmatprep.subr.bf16.mxu0 0
    %907 = vmatpush2.bf16.msra.mxu0 0
    %908 = vmatprep.subr.bf16.mxu0 0
    %909 = vmatpush2.bf16.msra.mxu0 0
    %910 = vmatprep.subr.bf16.mxu0 0
    %911 = vmatpush2.bf16.msra.mxu0 0
    %912 = vmatprep.subr.bf16.mxu0 0
    %913 = vmatpush2.bf16.msra.mxu0 0
    %914 = vmatprep.mubr.bf16.mxu0 0
    %915 = vmatmul.mubr.bf16.gmra.mxu0 %v866
    %v916 = vpop.f32.mrf.mxu0
    %v917 = vadd.f32 %v757, %v916
    %v918 = vpop.f32.mrf.mxu0
    %v919 = vadd.f32 %v757, %v918
    %v920 = vpop.f32.mrf.mxu0
    %v921 = vadd.f32 %v762, %v920
    %v922 = vpop.f32.mrf.mxu0
    %v923 = vadd.f32 %v762, %v922
    %924 = vmatprep.mubr.bf16.mxu0 0
    %925 = vmatmul.mubr.bf16.gmra.mxu0 %v867
    %v926 = vpop.f32.mrf.mxu0
    %v927 = vadd.f32 %v767, %v926
    %v928 = vpop.f32.mrf.mxu0
    %v929 = vadd.f32 %v767, %v928
    %v930 = vpop.f32.mrf.mxu0
    %v931 = vadd.f32 %v772, %v930
    %v932 = vpop.f32.mrf.mxu0
    %v933 = vadd.f32 %v772, %v932
    %934 = vmatprep.mubr.bf16.mxu0 0
    %935 = vmatmul.mubr.bf16.gmra.mxu0 %v868
    %v936 = vpop.f32.mrf.mxu0
    %v937 = vadd.f32 %v777, %v936
    %v938 = vpop.f32.mrf.mxu0
    %v939 = vadd.f32 %v777, %v938
    %v940 = vpop.f32.mrf.mxu0
    %v941 = vadd.f32 %v782, %v940
    %v942 = vpop.f32.mrf.mxu0
    %v943 = vadd.f32 %v782, %v942
    %944 = vmatprep.mubr.bf16.mxu0 0
    %945 = vmatmul.mubr.bf16.gmra.mxu0 %v869
    %v946 = vpop.f32.mrf.mxu0
    %v947 = vadd.f32 %v787, %v946
    %v948 = vpop.f32.mrf.mxu0
    %v949 = vadd.f32 %v787, %v948
    %v950 = vpop.f32.mrf.mxu0
    %v951 = vadd.f32 %v792, %v950
    %v952 = vpop.f32.mrf.mxu0
    %v953 = vadd.f32 %v792, %v952
    %954 = vmatprep.mubr.bf16.mxu0 0
    %955 = vmatmul.mubr.bf16.gmra.mxu0 %v870
    %v956 = vpop.f32.mrf.mxu0
    %v957 = vadd.f32 %v797, %v956
    %v958 = vpop.f32.mrf.mxu0
    %v959 = vadd.f32 %v797, %v958
    %v960 = vpop.f32.mrf.mxu0
    %v961 = vadd.f32 %v802, %v960
    %v962 = vpop.f32.mrf.mxu0
    %v963 = vadd.f32 %v802, %v962
    %964 = vmatprep.mubr.bf16.mxu0 0
    %965 = vmatmul.mubr.bf16.gmra.mxu0 %v871
    %v966 = vpop.f32.mrf.mxu0
    %v967 = vadd.f32 %v807, %v966
    %v968 = vpop.f32.mrf.mxu0
    %v969 = vadd.f32 %v807, %v968
    %v970 = vpop.f32.mrf.mxu0
    %v971 = vadd.f32 %v812, %v970
    %v972 = vpop.f32.mrf.mxu0
    %v973 = vadd.f32 %v812, %v972
    %974 = vmatprep.mubr.bf16.mxu0 0
    %975 = vmatmul.mubr.bf16.gmra.mxu0 %v872
    %v976 = vpop.f32.mrf.mxu0
    %v977 = vadd.f32 %v817, %v976
    %v978 = vpop.f32.mrf.mxu0
    %v979 = vadd.f32 %v817, %v978
    %v980 = vpop.f32.mrf.mxu0
    %v981 = vadd.f32 %v822, %v980
    %v982 = vpop.f32.mrf.mxu0
    %v983 = vadd.f32 %v822, %v982
    %984 = vmatprep.mubr.bf16.mxu0 0
    %985 = vmatmul.mubr.bf16.gmra.mxu0 %v873
    %v986 = vpop.f32.mrf.mxu0
    %v987 = vadd.f32 %v827, %v986
    %v988 = vpop.f32.mrf.mxu0
    %v989 = vadd.f32 %v827, %v988
    %v990 = vpop.f32.mrf.mxu0
    %v991 = vadd.f32 %v832, %v990
    %v992 = vpop.f32.mrf.mxu0
    %v993 = vadd.f32 %v832, %v992
    %994 = vdwg.mxu0
    %995 = vmatprep.subr.bf16.mxu0 %v721
    %996 = vmatpush1.bf16.msra.mxu0 %v720
    %997 = vmatprep.subr.bf16.mxu0 %v717
    %998 = vmatpush1.bf16.msra.mxu0 %v716
    %999 = vmatprep.subr.bf16.mxu0 %v713
    %1000 = vmatpush1.bf16.msra.mxu0 %v712
    %1001 = vmatprep.subr.bf16.mxu0 %v709
    %1002 = vmatpush1.bf16.msra.mxu0 %v708
    %1003 = vmatprep.subr.bf16.mxu0 %v705
    %1004 = vmatpush1.bf16.msra.mxu0 %v704
    %1005 = vmatprep.subr.bf16.mxu0 %v701
    %1006 = vmatpush1.bf16.msra.mxu0 %v700
    %1007 = vmatprep.subr.bf16.mxu0 %v697
    %1008 = vmatpush1.bf16.msra.mxu0 %v696
    %1009 = vmatprep.subr.bf16.mxu0 %v693
    %1010 = vmatpush1.bf16.msra.mxu0 %v692
    %1011 = vmatprep.subr.bf16.mxu0 0
    %1012 = vmatpush2.bf16.msra.mxu0 0
    %1013 = vmatprep.subr.bf16.mxu0 0
    %1014 = vmatpush2.bf16.msra.mxu0 0
    %1015 = vmatprep.subr.bf16.mxu0 0
    %1016 = vmatpush2.bf16.msra.mxu0 0
    %1017 = vmatprep.subr.bf16.mxu0 0
    %1018 = vmatpush2.bf16.msra.mxu0 0
    %1019 = vmatprep.subr.bf16.mxu0 0
    %1020 = vmatpush2.bf16.msra.mxu0 0
    %1021 = vmatprep.subr.bf16.mxu0 0
    %1022 = vmatpush2.bf16.msra.mxu0 0
    %1023 = vmatprep.subr.bf16.mxu0 0
    %1024 = vmatpush2.bf16.msra.mxu0 0
    %1025 = vmatprep.subr.bf16.mxu0 0
    %1026 = vmatpush2.bf16.msra.mxu0 0
    %1027 = vmatprep.mubr.bf16.mxu0 0
    %1028 = vmatmul.mubr.bf16.gmra.mxu0 %v866
    %v1029 = vpop.f32.mrf.mxu0
    %v1030 = vadd.f32 %v757, %v1029
    %v1031 = vpop.f32.mrf.mxu0
    %v1032 = vadd.f32 %v757, %v1031
    %v1033 = vpop.f32.mrf.mxu0
    %v1034 = vadd.f32 %v762, %v1033
    %v1035 = vpop.f32.mrf.mxu0
    %v1036 = vadd.f32 %v762, %v1035
    %1037 = vmatprep.mubr.bf16.mxu0 0
    %1038 = vmatmul.mubr.bf16.gmra.mxu0 %v867
    %v1039 = vpop.f32.mrf.mxu0
    %v1040 = vadd.f32 %v767, %v1039
    %v1041 = vpop.f32.mrf.mxu0
    %v1042 = vadd.f32 %v767, %v1041
    %v1043 = vpop.f32.mrf.mxu0
    %v1044 = vadd.f32 %v772, %v1043
    %v1045 = vpop.f32.mrf.mxu0
    %v1046 = vadd.f32 %v772, %v1045
    %1047 = vmatprep.mubr.bf16.mxu0 0
    %1048 = vmatmul.mubr.bf16.gmra.mxu0 %v868
    %v1049 = vpop.f32.mrf.mxu0
    %v1050 = vadd.f32 %v777, %v1049
    %v1051 = vpop.f32.mrf.mxu0
    %v1052 = vadd.f32 %v777, %v1051
    %v1053 = vpop.f32.mrf.mxu0
    %v1054 = vadd.f32 %v782, %v1053
    %v1055 = vpop.f32.mrf.mxu0
    %v1056 = vadd.f32 %v782, %v1055
    %1057 = vmatprep.mubr.bf16.mxu0 0
    %1058 = vmatmul.mubr.bf16.gmra.mxu0 %v869
    %v1059 = vpop.f32.mrf.mxu0
    %v1060 = vadd.f32 %v787, %v1059
    %v1061 = vpop.f32.mrf.mxu0
    %v1062 = vadd.f32 %v787, %v1061
    %v1063 = vpop.f32.mrf.mxu0
    %v1064 = vadd.f32 %v792, %v1063
    %v1065 = vpop.f32.mrf.mxu0
    %v1066 = vadd.f32 %v792, %v1065
    %1067 = vmatprep.mubr.bf16.mxu0 0
    %1068 = vmatmul.mubr.bf16.gmra.mxu0 %v870
    %v1069 = vpop.f32.mrf.mxu0
    %v1070 = vadd.f32 %v797, %v1069
    %v1071 = vpop.f32.mrf.mxu0
    %v1072 = vadd.f32 %v797, %v1071
    %v1073 = vpop.f32.mrf.mxu0
    %v1074 = vadd.f32 %v802, %v1073
    %v1075 = vpop.f32.mrf.mxu0
    %v1076 = vadd.f32 %v802, %v1075
    %1077 = vmatprep.mubr.bf16.mxu0 0
    %1078 = vmatmul.mubr.bf16.gmra.mxu0 %v871
    %v1079 = vpop.f32.mrf.mxu0
    %v1080 = vadd.f32 %v807, %v1079
    %v1081 = vpop.f32.mrf.mxu0
    %v1082 = vadd.f32 %v807, %v1081
    %v1083 = vpop.f32.mrf.mxu0
    %v1084 = vadd.f32 %v812, %v1083
    %v1085 = vpop.f32.mrf.mxu0
    %v1086 = vadd.f32 %v812, %v1085
    %1087 = vmatprep.mubr.bf16.mxu0 0
    %1088 = vmatmul.mubr.bf16.gmra.mxu0 %v872
    %v1089 = vpop.f32.mrf.mxu0
    %v1090 = vadd.f32 %v817, %v1089
    %v1091 = vpop.f32.mrf.mxu0
    %v1092 = vadd.f32 %v817, %v1091
    %v1093 = vpop.f32.mrf.mxu0
    %v1094 = vadd.f32 %v822, %v1093
    %v1095 = vpop.f32.mrf.mxu0
    %v1096 = vadd.f32 %v822, %v1095
    %1097 = vmatprep.mubr.bf16.mxu0 0
    %1098 = vmatmul.mubr.bf16.gmra.mxu0 %v873
    %v1099 = vpop.f32.mrf.mxu0
    %v1100 = vadd.f32 %v827, %v1099
    %v1101 = vpop.f32.mrf.mxu0
    %v1102 = vadd.f32 %v827, %v1101
    %v1103 = vpop.f32.mrf.mxu0
    %v1104 = vadd.f32 %v832, %v1103
    %v1105 = vpop.f32.mrf.mxu0
    %v1106 = vadd.f32 %v832, %v1105
    %1107 = vdwg.mxu0
    %v1108 = vmax.f32 %v917, 0.0
    %v1109 = vmax.f32 %v919, 0.0
    %v1110 = vmax.f32 %v1030, 0.0
    %v1111 = vmax.f32 %v1032, 0.0
    %v1112 = vmax.f32 %v921, 0.0
    %v1113 = vmax.f32 %v923, 0.0
    %v1114 = vmax.f32 %v1034, 0.0
    %v1115 = vmax.f32 %v1036, 0.0
    %v1116 = vmax.f32 %v927, 0.0
    %v1117 = vmax.f32 %v929, 0.0
    %v1118 = vmax.f32 %v1040, 0.0
    %v1119 = vmax.f32 %v1042, 0.0
    %v1120 = vmax.f32 %v931, 0.0
    %v1121 = vmax.f32 %v933, 0.0
    %v1122 = vmax.f32 %v1044, 0.0
    %v1123 = vmax.f32 %v1046, 0.0
    %v1124 = vmax.f32 %v937, 0.0
    %v1125 = vmax.f32 %v939, 0.0
    %v1126 = vmax.f32 %v1050, 0.0
    %v1127 = vmax.f32 %v1052, 0.0
    %v1128 = vmax.f32 %v941, 0.0
    %v1129 = vmax.f32 %v943, 0.0
    %v1130 = vmax.f32 %v1054, 0.0
    %v1131 = vmax.f32 %v1056, 0.0
    %v1132 = vmax.f32 %v947, 0.0
    %v1133 = vmax.f32 %v949, 0.0
    %v1134 = vmax.f32 %v1060, 0.0
    %v1135 = vmax.f32 %v1062, 0.0
    %v1136 = vmax.f32 %v951, 0.0
    %v1137 = vmax.f32 %v953, 0.0
    %v1138 = vmax.f32 %v1064, 0.0
    %v1139 = vmax.f32 %v1066, 0.0
    %v1140 = vmax.f32 %v957, 0.0
    %v1141 = vmax.f32 %v959, 0.0
    %v1142 = vmax.f32 %v1070, 0.0
    %v1143 = vmax.f32 %v1072, 0.0
    %v1144 = vmax.f32 %v961, 0.0
    %v1145 = vmax.f32 %v963, 0.0
    %v1146 = vmax.f32 %v1074, 0.0
    %v1147 = vmax.f32 %v1076, 0.0
    %v1148 = vmax.f32 %v967, 0.0
    %v1149 = vmax.f32 %v969, 0.0
    %v1150 = vmax.f32 %v1080, 0.0
    %v1151 = vmax.f32 %v1082, 0.0
    %v1152 = vmax.f32 %v971, 0.0
    %v1153 = vmax.f32 %v973, 0.0
    %v1154 = vmax.f32 %v1084, 0.0
    %v1155 = vmax.f32 %v1086, 0.0
    %v1156 = vmax.f32 %v977, 0.0
    %v1157 = vmax.f32 %v979, 0.0
    %v1158 = vmax.f32 %v1090, 0.0
    %v1159 = vmax.f32 %v1092, 0.0
    %v1160 = vmax.f32 %v981, 0.0
    %v1161 = vmax.f32 %v983, 0.0
    %v1162 = vmax.f32 %v1094, 0.0
    %v1163 = vmax.f32 %v1096, 0.0
    %v1164 = vmax.f32 %v987, 0.0
    %v1165 = vmax.f32 %v989, 0.0
    %v1166 = vmax.f32 %v1100, 0.0
    %v1167 = vmax.f32 %v1102, 0.0
    %v1168 = vmax.f32 %v991, 0.0
    %v1169 = vmax.f32 %v993, 0.0
    %v1170 = vmax.f32 %v1104, 0.0
    %v1171 = vmax.f32 %v1106, 0.0
    %v1172 = vpack.c.bf16 %v1112, %v1108
    %v1173 = vpack.c.bf16 %v1113, %v1109
    %v1174 = vpack.c.bf16 %v1114, %v1110
    %v1175 = vpack.c.bf16 %v1115, %v1111
    %v1176 = vpack.c.bf16 %v1120, %v1116
    %v1177 = vpack.c.bf16 %v1121, %v1117
    %v1178 = vpack.c.bf16 %v1122, %v1118
    %v1179 = vpack.c.bf16 %v1123, %v1119
    %v1180 = vpack.c.bf16 %v1128, %v1124
    %v1181 = vpack.c.bf16 %v1129, %v1125
    %v1182 = vpack.c.bf16 %v1130, %v1126
    %v1183 = vpack.c.bf16 %v1131, %v1127
    %v1184 = vpack.c.bf16 %v1136, %v1132
    %v1185 = vpack.c.bf16 %v1137, %v1133
    %v1186 = vpack.c.bf16 %v1138, %v1134
    %v1187 = vpack.c.bf16 %v1139, %v1135
    %v1188 = vpack.c.bf16 %v1144, %v1140
    %v1189 = vpack.c.bf16 %v1145, %v1141
    %v1190 = vpack.c.bf16 %v1146, %v1142
    %v1191 = vpack.c.bf16 %v1147, %v1143
    %v1192 = vpack.c.bf16 %v1152, %v1148
    %v1193 = vpack.c.bf16 %v1153, %v1149
    %v1194 = vpack.c.bf16 %v1154, %v1150
    %v1195 = vpack.c.bf16 %v1155, %v1151
    %v1196 = vpack.c.bf16 %v1160, %v1156
    %v1197 = vpack.c.bf16 %v1161, %v1157
    %v1198 = vpack.c.bf16 %v1162, %v1158
    %v1199 = vpack.c.bf16 %v1163, %v1159
    %v1200 = vpack.c.bf16 %v1168, %v1164
    %v1201 = vpack.c.bf16 %v1169, %v1165
    %v1202 = vpack.c.bf16 %v1170, %v1166
    %v1203 = vpack.c.bf16 %v1171, %v1167
    %v1204 = vld [vmem:[#allocation2] sm:$0xf]
    %v1205 = vld [vmem:[#allocation2 + $0x4] sm:$0xf]
    %v1206 = vld [vmem:[#allocation2 + $0x8] sm:$0xf]
    %v1207 = vld [vmem:[#allocation2 + $0xc] sm:$0xf]
    %v1208 = vld [vmem:[#allocation2 + $0x10] sm:$0xf]
    %v1209 = vld [vmem:[#allocation2 + $0x14] sm:$0xf]
    %v1210 = vld [vmem:[#allocation2 + $0x18] sm:$0xf]
    %v1211 = vld [vmem:[#allocation2 + $0x1c] sm:$0xf]
    %v1212 = vld [vmem:[#allocation2 + $0x20] sm:$0xf]
    %v1213 = vld [vmem:[#allocation2 + $0x24] sm:$0xf]
    %v1214 = vld [vmem:[#allocation2 + $0x28] sm:$0xf]
    %v1215 = vld [vmem:[#allocation2 + $0x2c] sm:$0xf]
    %v1216 = vld [vmem:[#allocation2 + $0x30] sm:$0xf]
    %v1217 = vld [vmem:[#allocation2 + $0x34] sm:$0xf]
    %v1218 = vld [vmem:[#allocation2 + $0x38] sm:$0xf]
    %v1219 = vld [vmem:[#allocation2 + $0x3c] sm:$0xf]
    %v1220 = vld [vmem:[%s6] sm:$0xff]
    %v1221 = vld [vmem:[%s6 + $0x8] sm:$0xff]
    %v1222 = vld [vmem:[%s6 + $0x10] sm:$0xff]
    %v1223 = vld [vmem:[%s6 + $0x18] sm:$0xff]
    %v1224 = vld [vmem:[%s6 + $0x20] sm:$0xff]
    %v1225 = vld [vmem:[%s6 + $0x28] sm:$0xff]
    %v1226 = vld [vmem:[%s6 + $0x30] sm:$0xff]
    %v1227 = vld [vmem:[%s6 + $0x38] sm:$0xff]
    %v1228 = vld [vmem:[%s6 + $0x40] sm:$0xff]
    %v1229 = vld [vmem:[%s6 + $0x48] sm:$0xff]
    %v1230 = vld [vmem:[%s6 + $0x50] sm:$0xff]
    %v1231 = vld [vmem:[%s6 + $0x58] sm:$0xff]
    %v1232 = vld [vmem:[%s6 + $0x60] sm:$0xff]
    %v1233 = vld [vmem:[%s6 + $0x68] sm:$0xff]
    %v1234 = vld [vmem:[%s6 + $0x70] sm:$0xff]
    %v1235 = vld [vmem:[%s6 + $0x78] sm:$0xff]
    %1237 = vset.pattern.permute.xlu0 0
    %1238 = vperm.xlu0 %1237, %v1220
    %v1239 = vpop.permute.xlu0 %1238
    %1242 = vset.pattern.permute.xlu0 0
    %1243 = vperm.xlu0 %1242, %v1221
    %v1244 = vpop.permute.xlu0 %1243
    %1247 = vset.pattern.permute.xlu0 0
    %1248 = vperm.xlu0 %1247, %v1222
    %v1249 = vpop.permute.xlu0 %1248
    %1252 = vset.pattern.permute.xlu0 0
    %1253 = vperm.xlu0 %1252, %v1223
    %v1254 = vpop.permute.xlu0 %1253
    %1257 = vset.pattern.permute.xlu0 0
    %1258 = vperm.xlu0 %1257, %v1224
    %v1259 = vpop.permute.xlu0 %1258
    %1262 = vset.pattern.permute.xlu0 0
    %1263 = vperm.xlu0 %1262, %v1225
    %v1264 = vpop.permute.xlu0 %1263
    %1267 = vset.pattern.permute.xlu0 0
    %1268 = vperm.xlu0 %1267, %v1226
    %v1269 = vpop.permute.xlu0 %1268
    %1272 = vset.pattern.permute.xlu0 0
    %1273 = vperm.xlu0 %1272, %v1227
    %v1274 = vpop.permute.xlu0 %1273
    %1277 = vset.pattern.permute.xlu0 0
    %1278 = vperm.xlu0 %1277, %v1228
    %v1279 = vpop.permute.xlu0 %1278
    %1282 = vset.pattern.permute.xlu0 0
    %1283 = vperm.xlu0 %1282, %v1229
    %v1284 = vpop.permute.xlu0 %1283
    %1287 = vset.pattern.permute.xlu0 0
    %1288 = vperm.xlu0 %1287, %v1230
    %v1289 = vpop.permute.xlu0 %1288
    %1292 = vset.pattern.permute.xlu0 0
    %1293 = vperm.xlu0 %1292, %v1231
    %v1294 = vpop.permute.xlu0 %1293
    %1297 = vset.pattern.permute.xlu0 0
    %1298 = vperm.xlu0 %1297, %v1232
    %v1299 = vpop.permute.xlu0 %1298
    %1302 = vset.pattern.permute.xlu0 0
    %1303 = vperm.xlu0 %1302, %v1233
    %v1304 = vpop.permute.xlu0 %1303
    %1307 = vset.pattern.permute.xlu0 0
    %1308 = vperm.xlu0 %1307, %v1234
    %v1309 = vpop.permute.xlu0 %1308
    %1312 = vset.pattern.permute.xlu0 0
    %1313 = vperm.xlu0 %1312, %v1235
    %v1314 = vpop.permute.xlu0 %1313
    %v1332 = vunpack.c.l.b16 %v1204
    %v1333 = vunpack.c.l.b16 %v1205
    %v1334 = vunpack.c.l.b16 %v1206
    %v1335 = vunpack.c.l.b16 %v1207
    %v1336 = vunpack.c.l.b16 %v1208
    %v1337 = vunpack.c.l.b16 %v1209
    %v1338 = vunpack.c.l.b16 %v1210
    %v1339 = vunpack.c.l.b16 %v1211
    %v1340 = vunpack.c.l.b16 %v1212
    %v1341 = vunpack.c.l.b16 %v1213
    %v1342 = vunpack.c.l.b16 %v1214
    %v1343 = vunpack.c.l.b16 %v1215
    %v1344 = vunpack.c.l.b16 %v1216
    %v1345 = vunpack.c.l.b16 %v1217
    %v1346 = vunpack.c.l.b16 %v1218
    %v1347 = vunpack.c.l.b16 %v1219
    %v1348 = vpack.c.b16 %v1333, %v1332
    %v1349 = vpack.c.b16 %v1335, %v1334
    %v1350 = vpack.c.b16 %v1337, %v1336
    %v1351 = vpack.c.b16 %v1339, %v1338
    %v1352 = vpack.c.b16 %v1341, %v1340
    %v1353 = vpack.c.b16 %v1343, %v1342
    %v1354 = vpack.c.b16 %v1345, %v1344
    %v1355 = vpack.c.b16 %v1347, %v1346
    %1364 = vmatprep.subr.bf16.mxu0 %v1201
    %1365 = vmatpush1.bf16.msra.mxu0 %v1200
    %1366 = vmatprep.subr.bf16.mxu0 %v1197
    %1367 = vmatpush1.bf16.msra.mxu0 %v1196
    %1368 = vmatprep.subr.bf16.mxu0 %v1193
    %1369 = vmatpush1.bf16.msra.mxu0 %v1192
    %1370 = vmatprep.subr.bf16.mxu0 %v1189
    %1371 = vmatpush1.bf16.msra.mxu0 %v1188
    %1372 = vmatprep.subr.bf16.mxu0 %v1185
    %1373 = vmatpush1.bf16.msra.mxu0 %v1184
    %1374 = vmatprep.subr.bf16.mxu0 %v1181
    %1375 = vmatpush1.bf16.msra.mxu0 %v1180
    %1376 = vmatprep.subr.bf16.mxu0 %v1177
    %1377 = vmatpush1.bf16.msra.mxu0 %v1176
    %1378 = vmatprep.subr.bf16.mxu0 %v1173
    %1379 = vmatpush1.bf16.msra.mxu0 %v1172
    %1380 = vmatprep.subr.bf16.mxu0 0
    %1381 = vmatpush2.bf16.msra.mxu0 0
    %1382 = vmatprep.subr.bf16.mxu0 0
    %1383 = vmatpush2.bf16.msra.mxu0 0
    %1384 = vmatprep.subr.bf16.mxu0 0
    %1385 = vmatpush2.bf16.msra.mxu0 0
    %1386 = vmatprep.subr.bf16.mxu0 0
    %1387 = vmatpush2.bf16.msra.mxu0 0
    %1388 = vmatprep.subr.bf16.mxu0 0
    %1389 = vmatpush2.bf16.msra.mxu0 0
    %1390 = vmatprep.subr.bf16.mxu0 0
    %1391 = vmatpush2.bf16.msra.mxu0 0
    %1392 = vmatprep.subr.bf16.mxu0 0
    %1393 = vmatpush2.bf16.msra.mxu0 0
    %1394 = vmatprep.subr.bf16.mxu0 0
    %1395 = vmatpush2.bf16.msra.mxu0 0
    %1396 = vmatprep.mubr.bf16.mxu0 0
    %1397 = vmatmul.mubr.bf16.gmra.mxu0 %v1348
    %v1398 = vpop.f32.mrf.mxu0
    %v1399 = vadd.f32 %v1239, %v1398
    %v1400 = vpop.f32.mrf.mxu0
    %v1401 = vadd.f32 %v1239, %v1400
    %v1402 = vpop.f32.mrf.mxu0
    %v1403 = vadd.f32 %v1244, %v1402
    %v1404 = vpop.f32.mrf.mxu0
    %v1405 = vadd.f32 %v1244, %v1404
    %1406 = vmatprep.mubr.bf16.mxu0 0
    %1407 = vmatmul.mubr.bf16.gmra.mxu0 %v1349
    %v1408 = vpop.f32.mrf.mxu0
    %v1409 = vadd.f32 %v1249, %v1408
    %v1410 = vpop.f32.mrf.mxu0
    %v1411 = vadd.f32 %v1249, %v1410
    %v1412 = vpop.f32.mrf.mxu0
    %v1413 = vadd.f32 %v1254, %v1412
    %v1414 = vpop.f32.mrf.mxu0
    %v1415 = vadd.f32 %v1254, %v1414
    %1416 = vmatprep.mubr.bf16.mxu0 0
    %1417 = vmatmul.mubr.bf16.gmra.mxu0 %v1350
    %v1418 = vpop.f32.mrf.mxu0
    %v1419 = vadd.f32 %v1259, %v1418
    %v1420 = vpop.f32.mrf.mxu0
    %v1421 = vadd.f32 %v1259, %v1420
    %v1422 = vpop.f32.mrf.mxu0
    %v1423 = vadd.f32 %v1264, %v1422
    %v1424 = vpop.f32.mrf.mxu0
    %v1425 = vadd.f32 %v1264, %v1424
    %1426 = vmatprep.mubr.bf16.mxu0 0
    %1427 = vmatmul.mubr.bf16.gmra.mxu0 %v1351
    %v1428 = vpop.f32.mrf.mxu0
    %v1429 = vadd.f32 %v1269, %v1428
    %v1430 = vpop.f32.mrf.mxu0
    %v1431 = vadd.f32 %v1269, %v1430
    %v1432 = vpop.f32.mrf.mxu0
    %v1433 = vadd.f32 %v1274, %v1432
    %v1434 = vpop.f32.mrf.mxu0
    %v1435 = vadd.f32 %v1274, %v1434
    %1436 = vmatprep.mubr.bf16.mxu0 0
    %1437 = vmatmul.mubr.bf16.gmra.mxu0 %v1352
    %v1438 = vpop.f32.mrf.mxu0
    %v1439 = vadd.f32 %v1279, %v1438
    %v1440 = vpop.f32.mrf.mxu0
    %v1441 = vadd.f32 %v1279, %v1440
    %v1442 = vpop.f32.mrf.mxu0
    %v1443 = vadd.f32 %v1284, %v1442
    %v1444 = vpop.f32.mrf.mxu0
    %v1445 = vadd.f32 %v1284, %v1444
    %1446 = vmatprep.mubr.bf16.mxu0 0
    %1447 = vmatmul.mubr.bf16.gmra.mxu0 %v1353
    %v1448 = vpop.f32.mrf.mxu0
    %v1449 = vadd.f32 %v1289, %v1448
    %v1450 = vpop.f32.mrf.mxu0
    %v1451 = vadd.f32 %v1289, %v1450
    %v1452 = vpop.f32.mrf.mxu0
    %v1453 = vadd.f32 %v1294, %v1452
    %v1454 = vpop.f32.mrf.mxu0
    %v1455 = vadd.f32 %v1294, %v1454
    %1456 = vmatprep.mubr.bf16.mxu0 0
    %1457 = vmatmul.mubr.bf16.gmra.mxu0 %v1354
    %v1458 = vpop.f32.mrf.mxu0
    %v1459 = vadd.f32 %v1299, %v1458
    %v1460 = vpop.f32.mrf.mxu0
    %v1461 = vadd.f32 %v1299, %v1460
    %v1462 = vpop.f32.mrf.mxu0
    %v1463 = vadd.f32 %v1304, %v1462
    %v1464 = vpop.f32.mrf.mxu0
    %v1465 = vadd.f32 %v1304, %v1464
    %1466 = vmatprep.mubr.bf16.mxu0 0
    %1467 = vmatmul.mubr.bf16.gmra.mxu0 %v1355
    %v1468 = vpop.f32.mrf.mxu0
    %v1469 = vadd.f32 %v1309, %v1468
    %v1470 = vpop.f32.mrf.mxu0
    %v1471 = vadd.f32 %v1309, %v1470
    %v1472 = vpop.f32.mrf.mxu0
    %v1473 = vadd.f32 %v1314, %v1472
    %v1474 = vpop.f32.mrf.mxu0
    %v1475 = vadd.f32 %v1314, %v1474
    %1476 = vdwg.mxu0
    %1477 = vmatprep.subr.bf16.mxu0 %v1203
    %1478 = vmatpush1.bf16.msra.mxu0 %v1202
    %1479 = vmatprep.subr.bf16.mxu0 %v1199
    %1480 = vmatpush1.bf16.msra.mxu0 %v1198
    %1481 = vmatprep.subr.bf16.mxu0 %v1195
    %1482 = vmatpush1.bf16.msra.mxu0 %v1194
    %1483 = vmatprep.subr.bf16.mxu0 %v1191
    %1484 = vmatpush1.bf16.msra.mxu0 %v1190
    %1485 = vmatprep.subr.bf16.mxu0 %v1187
    %1486 = vmatpush1.bf16.msra.mxu0 %v1186
    %1487 = vmatprep.subr.bf16.mxu0 %v1183
    %1488 = vmatpush1.bf16.msra.mxu0 %v1182
    %1489 = vmatprep.subr.bf16.mxu0 %v1179
    %1490 = vmatpush1.bf16.msra.mxu0 %v1178
    %1491 = vmatprep.subr.bf16.mxu0 %v1175
    %1492 = vmatpush1.bf16.msra.mxu0 %v1174
    %1493 = vmatprep.subr.bf16.mxu0 0
    %1494 = vmatpush2.bf16.msra.mxu0 0
    %1495 = vmatprep.subr.bf16.mxu0 0
    %1496 = vmatpush2.bf16.msra.mxu0 0
    %1497 = vmatprep.subr.bf16.mxu0 0
    %1498 = vmatpush2.bf16.msra.mxu0 0
    %1499 = vmatprep.subr.bf16.mxu0 0
    %1500 = vmatpush2.bf16.msra.mxu0 0
    %1501 = vmatprep.subr.bf16.mxu0 0
    %1502 = vmatpush2.bf16.msra.mxu0 0
    %1503 = vmatprep.subr.bf16.mxu0 0
    %1504 = vmatpush2.bf16.msra.mxu0 0
    %1505 = vmatprep.subr.bf16.mxu0 0
    %1506 = vmatpush2.bf16.msra.mxu0 0
    %1507 = vmatprep.subr.bf16.mxu0 0
    %1508 = vmatpush2.bf16.msra.mxu0 0
    %1509 = vmatprep.mubr.bf16.mxu0 0
    %1510 = vmatmul.mubr.bf16.gmra.mxu0 %v1348
    %v1511 = vpop.f32.mrf.mxu0
    %v1512 = vadd.f32 %v1239, %v1511
    %v1513 = vpop.f32.mrf.mxu0
    %v1514 = vadd.f32 %v1239, %v1513
    %v1515 = vpop.f32.mrf.mxu0
    %v1516 = vadd.f32 %v1244, %v1515
    %v1517 = vpop.f32.mrf.mxu0
    %v1518 = vadd.f32 %v1244, %v1517
    %1519 = vmatprep.mubr.bf16.mxu0 0
    %1520 = vmatmul.mubr.bf16.gmra.mxu0 %v1349
    %v1521 = vpop.f32.mrf.mxu0
    %v1522 = vadd.f32 %v1249, %v1521
    %v1523 = vpop.f32.mrf.mxu0
    %v1524 = vadd.f32 %v1249, %v1523
    %v1525 = vpop.f32.mrf.mxu0
    %v1526 = vadd.f32 %v1254, %v1525
    %v1527 = vpop.f32.mrf.mxu0
    %v1528 = vadd.f32 %v1254, %v1527
    %1529 = vmatprep.mubr.bf16.mxu0 0
    %1530 = vmatmul.mubr.bf16.gmra.mxu0 %v1350
    %v1531 = vpop.f32.mrf.mxu0
    %v1532 = vadd.f32 %v1259, %v1531
    %v1533 = vpop.f32.mrf.mxu0
    %v1534 = vadd.f32 %v1259, %v1533
    %v1535 = vpop.f32.mrf.mxu0
    %v1536 = vadd.f32 %v1264, %v1535
    %v1537 = vpop.f32.mrf.mxu0
    %v1538 = vadd.f32 %v1264, %v1537
    %1539 = vmatprep.mubr.bf16.mxu0 0
    %1540 = vmatmul.mubr.bf16.gmra.mxu0 %v1351
    %v1541 = vpop.f32.mrf.mxu0
    %v1542 = vadd.f32 %v1269, %v1541
    %v1543 = vpop.f32.mrf.mxu0
    %v1544 = vadd.f32 %v1269, %v1543
    %v1545 = vpop.f32.mrf.mxu0
    %v1546 = vadd.f32 %v1274, %v1545
    %v1547 = vpop.f32.mrf.mxu0
    %v1548 = vadd.f32 %v1274, %v1547
    %1549 = vmatprep.mubr.bf16.mxu0 0
    %1550 = vmatmul.mubr.bf16.gmra.mxu0 %v1352
    %v1551 = vpop.f32.mrf.mxu0
    %v1552 = vadd.f32 %v1279, %v1551
    %v1553 = vpop.f32.mrf.mxu0
    %v1554 = vadd.f32 %v1279, %v1553
    %v1555 = vpop.f32.mrf.mxu0
    %v1556 = vadd.f32 %v1284, %v1555
    %v1557 = vpop.f32.mrf.mxu0
    %v1558 = vadd.f32 %v1284, %v1557
    %1559 = vmatprep.mubr.bf16.mxu0 0
    %1560 = vmatmul.mubr.bf16.gmra.mxu0 %v1353
    %v1561 = vpop.f32.mrf.mxu0
    %v1562 = vadd.f32 %v1289, %v1561
    %v1563 = vpop.f32.mrf.mxu0
    %v1564 = vadd.f32 %v1289, %v1563
    %v1565 = vpop.f32.mrf.mxu0
    %v1566 = vadd.f32 %v1294, %v1565
    %v1567 = vpop.f32.mrf.mxu0
    %v1568 = vadd.f32 %v1294, %v1567
    %1569 = vmatprep.mubr.bf16.mxu0 0
    %1570 = vmatmul.mubr.bf16.gmra.mxu0 %v1354
    %v1571 = vpop.f32.mrf.mxu0
    %v1572 = vadd.f32 %v1299, %v1571
    %v1573 = vpop.f32.mrf.mxu0
    %v1574 = vadd.f32 %v1299, %v1573
    %v1575 = vpop.f32.mrf.mxu0
    %v1576 = vadd.f32 %v1304, %v1575
    %v1577 = vpop.f32.mrf.mxu0
    %v1578 = vadd.f32 %v1304, %v1577
    %1579 = vmatprep.mubr.bf16.mxu0 0
    %1580 = vmatmul.mubr.bf16.gmra.mxu0 %v1355
    %v1581 = vpop.f32.mrf.mxu0
    %v1582 = vadd.f32 %v1309, %v1581
    %v1583 = vpop.f32.mrf.mxu0
    %v1584 = vadd.f32 %v1309, %v1583
    %v1585 = vpop.f32.mrf.mxu0
    %v1586 = vadd.f32 %v1314, %v1585
    %v1587 = vpop.f32.mrf.mxu0
    %v1588 = vadd.f32 %v1314, %v1587
    %1589 = vdwg.mxu0
    %v1590 = vmax.f32 %v1399, 0.0
    %v1591 = vmax.f32 %v1401, 0.0
    %v1592 = vmax.f32 %v1512, 0.0
    %v1593 = vmax.f32 %v1514, 0.0
    %v1594 = vmax.f32 %v1403, 0.0
    %v1595 = vmax.f32 %v1405, 0.0
    %v1596 = vmax.f32 %v1516, 0.0
    %v1597 = vmax.f32 %v1518, 0.0
    %v1598 = vmax.f32 %v1409, 0.0
    %v1599 = vmax.f32 %v1411, 0.0
    %v1600 = vmax.f32 %v1522, 0.0
    %v1601 = vmax.f32 %v1524, 0.0
    %v1602 = vmax.f32 %v1413, 0.0
    %v1603 = vmax.f32 %v1415, 0.0
    %v1604 = vmax.f32 %v1526, 0.0
    %v1605 = vmax.f32 %v1528, 0.0
    %v1606 = vmax.f32 %v1419, 0.0
    %v1607 = vmax.f32 %v1421, 0.0
    %v1608 = vmax.f32 %v1532, 0.0
    %v1609 = vmax.f32 %v1534, 0.0
    %v1610 = vmax.f32 %v1423, 0.0
    %v1611 = vmax.f32 %v1425, 0.0
    %v1612 = vmax.f32 %v1536, 0.0
    %v1613 = vmax.f32 %v1538, 0.0
    %v1614 = vmax.f32 %v1429, 0.0
    %v1615 = vmax.f32 %v1431, 0.0
    %v1616 = vmax.f32 %v1542, 0.0
    %v1617 = vmax.f32 %v1544, 0.0
    %v1618 = vmax.f32 %v1433, 0.0
    %v1619 = vmax.f32 %v1435, 0.0
    %v1620 = vmax.f32 %v1546, 0.0
    %v1621 = vmax.f32 %v1548, 0.0
    %v1622 = vmax.f32 %v1439, 0.0
    %v1623 = vmax.f32 %v1441, 0.0
    %v1624 = vmax.f32 %v1552, 0.0
    %v1625 = vmax.f32 %v1554, 0.0
    %v1626 = vmax.f32 %v1443, 0.0
    %v1627 = vmax.f32 %v1445, 0.0
    %v1628 = vmax.f32 %v1556, 0.0
    %v1629 = vmax.f32 %v1558, 0.0
    %v1630 = vmax.f32 %v1449, 0.0
    %v1631 = vmax.f32 %v1451, 0.0
    %v1632 = vmax.f32 %v1562, 0.0
    %v1633 = vmax.f32 %v1564, 0.0
    %v1634 = vmax.f32 %v1453, 0.0
    %v1635 = vmax.f32 %v1455, 0.0
    %v1636 = vmax.f32 %v1566, 0.0
    %v1637 = vmax.f32 %v1568, 0.0
    %v1638 = vmax.f32 %v1459, 0.0
    %v1639 = vmax.f32 %v1461, 0.0
    %v1640 = vmax.f32 %v1572, 0.0
    %v1641 = vmax.f32 %v1574, 0.0
    %v1642 = vmax.f32 %v1463, 0.0
    %v1643 = vmax.f32 %v1465, 0.0
    %v1644 = vmax.f32 %v1576, 0.0
    %v1645 = vmax.f32 %v1578, 0.0
    %v1646 = vmax.f32 %v1469, 0.0
    %v1647 = vmax.f32 %v1471, 0.0
    %v1648 = vmax.f32 %v1582, 0.0
    %v1649 = vmax.f32 %v1584, 0.0
    %v1650 = vmax.f32 %v1473, 0.0
    %v1651 = vmax.f32 %v1475, 0.0
    %v1652 = vmax.f32 %v1586, 0.0
    %v1653 = vmax.f32 %v1588, 0.0
    %v1654 = vpack.c.bf16 %v1594, %v1590
    %v1655 = vpack.c.bf16 %v1595, %v1591
    %v1656 = vpack.c.bf16 %v1596, %v1592
    %v1657 = vpack.c.bf16 %v1597, %v1593
    %v1658 = vpack.c.bf16 %v1602, %v1598
    %v1659 = vpack.c.bf16 %v1603, %v1599
    %v1660 = vpack.c.bf16 %v1604, %v1600
    %v1661 = vpack.c.bf16 %v1605, %v1601
    %v1662 = vpack.c.bf16 %v1610, %v1606
    %v1663 = vpack.c.bf16 %v1611, %v1607
    %v1664 = vpack.c.bf16 %v1612, %v1608
    %v1665 = vpack.c.bf16 %v1613, %v1609
    %v1666 = vpack.c.bf16 %v1618, %v1614
    %v1667 = vpack.c.bf16 %v1619, %v1615
    %v1668 = vpack.c.bf16 %v1620, %v1616
    %v1669 = vpack.c.bf16 %v1621, %v1617
    %v1670 = vpack.c.bf16 %v1626, %v1622
    %v1671 = vpack.c.bf16 %v1627, %v1623
    %v1672 = vpack.c.bf16 %v1628, %v1624
    %v1673 = vpack.c.bf16 %v1629, %v1625
    %v1674 = vpack.c.bf16 %v1634, %v1630
    %v1675 = vpack.c.bf16 %v1635, %v1631
    %v1676 = vpack.c.bf16 %v1636, %v1632
    %v1677 = vpack.c.bf16 %v1637, %v1633
    %v1678 = vpack.c.bf16 %v1642, %v1638
    %v1679 = vpack.c.bf16 %v1643, %v1639
    %v1680 = vpack.c.bf16 %v1644, %v1640
    %v1681 = vpack.c.bf16 %v1645, %v1641
    %v1682 = vpack.c.bf16 %v1650, %v1646
    %v1683 = vpack.c.bf16 %v1651, %v1647
    %v1684 = vpack.c.bf16 %v1652, %v1648
    %v1685 = vpack.c.bf16 %v1653, %v1649
    %v1686 = vld [vmem:[%s7] sm:$0xf]
    %v1687 = vld [vmem:[%s8] sm:$0xff]
    %1689 = vset.pattern.permute.xlu0 0
    %1690 = vperm.xlu0 %1689, %v1687
    %v1691 = vpop.permute.xlu0 %1690
    %1693 = vmatprep.subr.bf16.mxu0 %v1683
    %1694 = vmatpush1.bf16.msra.mxu0 %v1682
    %1695 = vmatprep.subr.bf16.mxu0 %v1679
    %1696 = vmatpush1.bf16.msra.mxu0 %v1678
    %1697 = vmatprep.subr.bf16.mxu0 %v1675
    %1698 = vmatpush1.bf16.msra.mxu0 %v1674
    %1699 = vmatprep.subr.bf16.mxu0 %v1671
    %1700 = vmatpush1.bf16.msra.mxu0 %v1670
    %1701 = vmatprep.subr.bf16.mxu0 %v1667
    %1702 = vmatpush1.bf16.msra.mxu0 %v1666
    %1703 = vmatprep.subr.bf16.mxu0 %v1663
    %1704 = vmatpush1.bf16.msra.mxu0 %v1662
    %1705 = vmatprep.subr.bf16.mxu0 %v1659
    %1706 = vmatpush1.bf16.msra.mxu0 %v1658
    %1707 = vmatprep.subr.bf16.mxu0 %v1655
    %1708 = vmatpush1.bf16.msra.mxu0 %v1654
    %1709 = vmatprep.subr.bf16.mxu0 0
    %1710 = vmatpush2.bf16.msra.mxu0 0
    %1711 = vmatprep.subr.bf16.mxu0 0
    %1712 = vmatpush2.bf16.msra.mxu0 0
    %1713 = vmatprep.subr.bf16.mxu0 0
    %1714 = vmatpush2.bf16.msra.mxu0 0
    %1715 = vmatprep.subr.bf16.mxu0 0
    %1716 = vmatpush2.bf16.msra.mxu0 0
    %1717 = vmatprep.subr.bf16.mxu0 0
    %1718 = vmatpush2.bf16.msra.mxu0 0
    %1719 = vmatprep.subr.bf16.mxu0 0
    %1720 = vmatpush2.bf16.msra.mxu0 0
    %1721 = vmatprep.subr.bf16.mxu0 0
    %1722 = vmatpush2.bf16.msra.mxu0 0
    %1723 = vmatprep.subr.bf16.mxu0 0
    %1724 = vmatpush2.bf16.msra.mxu0 0
    %1725 = vmatprep.mubr.bf16.mxu0 0
    %1726 = vmatmul.mubr.bf16.gmra.mxu0 %v1686
    %v1727 = vpop.f32.mrf.mxu0
    %v1728 = vadd.f32 %v1691, %v1727
    %v1729 = vpop.f32.mrf.mxu0
    %v1730 = vadd.f32 %v1691, %v1729
    %v1731 = vpop.f32.mrf.mxu0
    %v1732 = vpop.f32.mrf.mxu0
    %1733 = vdwg.mxu0
    %1734 = vmatprep.subr.bf16.mxu0 %v1685
    %1735 = vmatpush1.bf16.msra.mxu0 %v1684
    %1736 = vmatprep.subr.bf16.mxu0 %v1681
    %1737 = vmatpush1.bf16.msra.mxu0 %v1680
    %1738 = vmatprep.subr.bf16.mxu0 %v1677
    %1739 = vmatpush1.bf16.msra.mxu0 %v1676
    %1740 = vmatprep.subr.bf16.mxu0 %v1673
    %1741 = vmatpush1.bf16.msra.mxu0 %v1672
    %1742 = vmatprep.subr.bf16.mxu0 %v1669
    %1743 = vmatpush1.bf16.msra.mxu0 %v1668
    %1744 = vmatprep.subr.bf16.mxu0 %v1665
    %1745 = vmatpush1.bf16.msra.mxu0 %v1664
    %1746 = vmatprep.subr.bf16.mxu0 %v1661
    %1747 = vmatpush1.bf16.msra.mxu0 %v1660
    %1748 = vmatprep.subr.bf16.mxu0 %v1657
    %1749 = vmatpush1.bf16.msra.mxu0 %v1656
    %1750 = vmatprep.subr.bf16.mxu0 0
    %1751 = vmatpush2.bf16.msra.mxu0 0
    %1752 = vmatprep.subr.bf16.mxu0 0
    %1753 = vmatpush2.bf16.msra.mxu0 0
    %1754 = vmatprep.subr.bf16.mxu0 0
    %1755 = vmatpush2.bf16.msra.mxu0 0
    %1756 = vmatprep.subr.bf16.mxu0 0
    %1757 = vmatpush2.bf16.msra.mxu0 0
    %1758 = vmatprep.subr.bf16.mxu0 0
    %1759 = vmatpush2.bf16.msra.mxu0 0
    %1760 = vmatprep.subr.bf16.mxu0 0
    %1761 = vmatpush2.bf16.msra.mxu0 0
    %1762 = vmatprep.subr.bf16.mxu0 0
    %1763 = vmatpush2.bf16.msra.mxu0 0
    %1764 = vmatprep.subr.bf16.mxu0 0
    %1765 = vmatpush2.bf16.msra.mxu0 0
    %1766 = vmatprep.mubr.bf16.mxu0 0
    %1767 = vmatmul.mubr.bf16.gmra.mxu0 %v1686
    %v1768 = vpop.f32.mrf.mxu0
    %v1769 = vadd.f32 %v1691, %v1768
    %v1770 = vpop.f32.mrf.mxu0
    %v1771 = vadd.f32 %v1691, %v1770
    %v1772 = vpop.f32.mrf.mxu0
    %v1773 = vpop.f32.mrf.mxu0
    %1774 = vdwg.mxu0
    %1775 = vst [vmem:[#allocation5] sm:$0xff] %v1728
    %1776 = vst [vmem:[#allocation5 + $0x8] sm:$0xff] %v1730
    %1777 = vst [vmem:[#allocation5 + $0x10] sm:$0xff] %v1769
    %1778 = vst [vmem:[#allocation5 + $0x18] sm:$0xff] %v1771
    // Predicated region
    $region42: #{tpu_custom_call.1} parent=1 // pred_check
      _
    $region43: #{tpu_custom_call.1} parent=1 // pred_check_branch
      %1780 = sbr.rel (0) target = $region45
    $region44: #{tpu_custom_call.1} parent=1 // pred_region
      %s1782 = ssub.s32 512, 512
      %1783 = vsyncadd [#allocation4], %s1782
      %s1785 = sshll.u32 [#allocation5], 4
      %s1786 = int_to_ptr.vmem [resolvable:$true] %s1785
      %1788 = dma.vmem_to_hbm [thread:$0]  %s1786, 512, %s9, [#allocation4]
    $region45: #{tpu_custom_call.1} parent=1 // pred_fallthru
      _
    // Predicated region
    $region46: #{tpu_custom_call.1} parent=1 // pred_check
      _
    $region47: #{tpu_custom_call.1} parent=1 // pred_check_branch
      %1790 = sbr.rel (0) target = $region49
    $region48: #{tpu_custom_call.1} parent=1 // pred_region
      %1791 = dma.done [#allocation4], 512
    $region49: #{tpu_custom_call.1} parent=1 // pred_fallthru
      _
    %1792 = vsyncpa [#allocation3], 1
    %1793 = vsyncpa [#allocation4], 1

</llo_original>
